<compile_context>
chip_gen: v6e
topology: v6e:2x2x1
jax: 0.10.0
libtpu: 0.0.40
codegen_flags: <defaults>
</compile_context>

<pallas_src>
import functools

import jax
import jax.numpy as jnp
import numpy as np
from jax import lax
from jax.experimental import pallas as pl
from jax.experimental.pallas import tpu as pltpu

# Small, module-consistent config (d_model scaled down from 512 -> 32).
D_MODEL = 32
N_HEADS = 4
HEAD_DIM = D_MODEL // N_HEADS
D_FF = 4 * D_MODEL
SEQ = 8
BATCH = 2
EPS = 1e-5           # PyTorch LayerNorm default
NEG_BIG = -1e30      # additive mask for cross-batch attention entries


def _ln(y, gamma, beta):
    mu = jnp.mean(y, axis=-1, keepdims=True)
    var = jnp.mean((y - mu) ** 2, axis=-1, keepdims=True)
    return (y - mu) * lax.rsqrt(var + EPS) * gamma + beta


def encoder_layer_kernel(x_ref, wqkv_ref, wo_ref, w1_ref, w2_ref, ln_ref, o_ref,
                         *, batch):
    """Single-invocation encoder layer over the flat token slab.

    x_ref:    (N, D)        N = S*B tokens, row n = s*B + b (seq-major)
    wqkv_ref: (D+1, 3D)     [Wq | Wk | Wv] with bias in the last row
    wo_ref:   (D+1, D)      Wo with bias in the last row
    w1_ref:   (D+1, 4D)     FFN W1 with bias in the last row
    w2_ref:   (4D+1, D)     FFN W2 with bias in the last row
    ln_ref:   (6, D)        rows: g_mha, b_mha, g1, b1, g2, b2
    """
    N = x_ref.shape[0]
    D = D_MODEL
    x = x_ref[...]                                   # (N, D)

    # --- unpack packed parameters (static row slices, no extra operands) ---
    wqkv = wqkv_ref[0:D, :]
    bqkv = wqkv_ref[D:D + 1, :]
    wo = wo_ref[0:D, :]
    bo = wo_ref[D:D + 1, :]
    w1 = w1_ref[0:D, :]
    b1 = w1_ref[D:D + 1, :]
    w2 = w2_ref[0:D_FF, :]
    b2 = w2_ref[D_FF:D_FF + 1, :]
    g_mha = ln_ref[0:1, :]
    b_mha = ln_ref[1:2, :]
    g1 = ln_ref[2:3, :]
    b1n = ln_ref[3:4, :]
    g2 = ln_ref[4:5, :]
    b2n = ln_ref[5:6, :]

    # --- fused QKV projection: one (N, D) x (D, 3D) matmul ---
    qkv = jnp.dot(x, wqkv, preferred_element_type=jnp.float32) + bqkv   # (N, 3D)

    # Tokens n1, n2 may attend to each other iff they share a batch element,
    # i.e. n1 % B == n2 % B (rows are interleaved seq-major).  Build an
    # additive bias once and reuse it across heads.
    ri = lax.broadcasted_iota(jnp.int32, (N, N), 0)
    ci = lax.broadcasted_iota(jnp.int32, (N, N), 1)
    attn_bias = jnp.where((ri % batch) == (ci % batch), 0.0, NEG_BIG)
    attn_bias = attn_bias.astype(jnp.float32)

    scale = jnp.float32(1.0 / np.sqrt(HEAD_DIM))

    # --- per-head score / softmax / AV (heads are tiny static constants) ---
    head_outs = []
    for h in range(N_HEADS):
        lo = h * HEAD_DIM
        q_h = qkv[:, lo:lo + HEAD_DIM]                       # (N, Dh)
        k_h = qkv[:, D + lo:D + lo + HEAD_DIM]               # (N, Dh)
        v_h = qkv[:, 2 * D + lo:2 * D + lo + HEAD_DIM]       # (N, Dh)
        s = lax.dot_general(q_h, k_h, (((1,), (1,)), ((), ())),
                            preferred_element_type=jnp.float32)
        s = s * scale + attn_bias                            # (N, N)
        s = s - jnp.max(s, axis=-1, keepdims=True)
        p = jnp.exp(s)
        denom = jnp.sum(p, axis=-1, keepdims=True)
        p = p * pl.reciprocal(denom, approx=False)
        head_outs.append(jnp.dot(p, v_h, preferred_element_type=jnp.float32))
    att = jnp.concatenate(head_outs, axis=-1)                # (N, D)

    # --- single fused output projection ---
    attn_out = jnp.dot(att, wo, preferred_element_type=jnp.float32) + bo

    # MultiHeadAttention wrapper: norm(query + dropout(attn_output))
    h1 = _ln(x + attn_out, g_mha, b_mha)
    # EncoderLayer: x = norm1(x + dropout(attn_output))
    h2 = _ln(x + h1, g1, b1n)

    # FFN: Linear(D, 4D) -> ReLU -> Linear(4D, D)
    f = jnp.maximum(jnp.dot(h2, w1, preferred_element_type=jnp.float32) + b1, 0.0)
    f = jnp.dot(f, w2, preferred_element_type=jnp.float32) + b2

    # x = norm2(x + dropout(ffn_output))
    # NOTE: output last dim is 32 (< 128 lanes) so the store is lane-masked;
    # acceptable at this size (see perf review item on lane-dense stores).
    o_ref[...] = _ln(h2 + f, g2, b2n)


def _full_spec(shape):
    nd = len(shape)
    return pl.BlockSpec(shape, lambda i, _nd=nd: (0,) * _nd)


def encoder_layer(x_sbd, params):
    """x_sbd: (S, B, D) float32 (batch_first=False) -> (S, B, D) float32."""
    S, B, D = x_sbd.shape
    N = S * B
    # Free row-major reshape (no transpose): row n = s*B + b.
    x2 = x_sbd.reshape(N, D).astype(jnp.float32)

    # Pack parameters into a handful of operands (bias as an extra weight row).
    wqkv = jnp.concatenate(
        [jnp.concatenate([params["wq"], params["wk"], params["wv"]], axis=1),
         jnp.concatenate([params["bq"], params["bk"], params["bv"]]).reshape(1, 3 * D)],
        axis=0)                                                          # (D+1, 3D)
    wo = jnp.concatenate([params["wo"], params["bo"].reshape(1, D)], axis=0)      # (D+1, D)
    w1 = jnp.concatenate([params["w1"], params["b1"].reshape(1, D_FF)], axis=0)   # (D+1, 4D)
    w2 = jnp.concatenate([params["w2"], params["b2"].reshape(1, D)], axis=0)      # (4D+1, D)
    ln = jnp.stack([params["g_mha"], params["b_mha"],
                    params["g1"], params["b1n"],
                    params["g2"], params["b2n"]], axis=0)                          # (6, D)

    operands = [x2, wqkv, wo, w1, w2, ln]

    out = pl.pallas_call(
        functools.partial(encoder_layer_kernel, batch=B),
        out_shape=jax.ShapeDtypeStruct((N, D), jnp.float32),
        grid=(1,),                                       # single invocation
        in_specs=[_full_spec(op.shape) for op in operands],
        out_specs=_full_spec((N, D)),
        compiler_params=pltpu.CompilerParams(dimension_semantics=("arbitrary",)),
    )(*operands)
    return out.reshape(S, B, D)


def ref_forward(x_sbd, p):
    """Pure-JAX reference (mirrors the PyTorch module in eval mode)."""
    x = jnp.transpose(x_sbd, (1, 0, 2)).astype(jnp.float32)   # (B, S, D)
    B, S, D = x.shape
    scale = jnp.float32(1.0 / np.sqrt(HEAD_DIM))
    q = x @ p["wq"] + p["bq"]
    k = x @ p["wk"] + p["bk"]
    v = x @ p["wv"] + p["bv"]
    qh = q.reshape(B, S, N_HEADS, HEAD_DIM).transpose(0, 2, 1, 3)
    kh = k.reshape(B, S, N_HEADS, HEAD_DIM).transpose(0, 2, 1, 3)
    vh = v.reshape(B, S, N_HEADS, HEAD_DIM).transpose(0, 2, 1, 3)
    s = jnp.einsum("bhqd,bhkd->bhqk", qh, kh) * scale
    a = jax.nn.softmax(s, axis=-1)
    o = jnp.einsum("bhqk,bhkd->bhqd", a, vh).transpose(0, 2, 1, 3).reshape(B, S, D)
    attn = o @ p["wo"] + p["bo"]

    h1 = _ln(x + attn, p["g_mha"], p["b_mha"])
    h2 = _ln(x + h1, p["g1"], p["b1n"])
    f = jnp.maximum(h2 @ p["w1"] + p["b1"], 0.0) @ p["w2"] + p["b2"]
    out = _ln(h2 + f, p["g2"], p["b2n"])
    return jnp.transpose(out, (1, 0, 2))                      # (S, B, D)


def init_params(key):
    ks = jax.random.split(key, 18)

    def w(k, shape, scale=0.05):
        return jax.random.normal(k, shape, jnp.float32) * scale

    p = {
        "wq": w(ks[0], (D_MODEL, D_MODEL)), "bq": w(ks[1], (D_MODEL,), 0.01),
        "wk": w(ks[2], (D_MODEL, D_MODEL)), "bk": w(ks[3], (D_MODEL,), 0.01),
        "wv": w(ks[4], (D_MODEL, D_MODEL)), "bv": w(ks[5], (D_MODEL,), 0.01),
        "wo": w(ks[6], (D_MODEL, D_MODEL)), "bo": w(ks[7], (D_MODEL,), 0.01),
        "w1": w(ks[8], (D_MODEL, D_FF)),    "b1": w(ks[9], (D_FF,), 0.01),
        "w2": w(ks[10], (D_FF, D_MODEL)),   "b2": w(ks[11], (D_MODEL,), 0.01),
        "g_mha": 1.0 + w(ks[12], (D_MODEL,), 0.02), "b_mha": w(ks[13], (D_MODEL,), 0.02),
        "g1":    1.0 + w(ks[14], (D_MODEL,), 0.02), "b1n":   w(ks[15], (D_MODEL,), 0.02),
        "g2":    1.0 + w(ks[16], (D_MODEL,), 0.02), "b2n":   w(ks[17], (D_MODEL,), 0.02),
    }
    return p


if __name__ == "__main__":
    key = jax.random.PRNGKey(0)
    k_x, k_p = jax.random.split(key)
    x = jax.random.normal(k_x, (SEQ, BATCH, D_MODEL), jnp.float32)  # (S, B, D)
    params = init_params(k_p)

    out = encoder_layer(x, params)
    jax.block_until_ready(out)

    ref = ref_forward(x, params)
    jax.block_until_ready(ref)

    assert out.shape == (SEQ, BATCH, D_MODEL)
    # Kernel matmuls use the MXU's default (single-pass bf16) path per the
    # performance review; tolerance is sized for that precision path.
    np.testing.assert_allclose(np.asarray(out), np.asarray(ref), rtol=1e-2, atol=1e-2)
    print("KERNEL_OK")
</pallas_src>

<mosaic_0001>
module attributes {stable_mosaic.version = 11 : i64} {
  func.func @encoder_layer_kernel(%arg0: i32, %arg1: memref<16x32xf32, #tpu.memory_space<vmem>>, %arg2: memref<33x96xf32, #tpu.memory_space<vmem>>, %arg3: memref<33x32xf32, #tpu.memory_space<vmem>>, %arg4: memref<33x128xf32, #tpu.memory_space<vmem>>, %arg5: memref<129x32xf32, #tpu.memory_space<vmem>>, %arg6: memref<6x32xf32, #tpu.memory_space<vmem>>, %arg7: memref<16x32xf32, #tpu.memory_space<vmem>>) attributes {dimension_semantics = [#tpu.dimension_semantics<arbitrary>], iteration_bounds = array<i64: 1>, scalar_prefetch = 0 : i64, scratch_operands = 0 : i64, tpu.core_type = #tpu.core_type<tc>, window_params = [{pipeline_mode = #tpu.pipeline_mode<synchronous>, transform_indices = @transform_0, window_bounds = array<i64: 16, 32>}, {pipeline_mode = #tpu.pipeline_mode<synchronous>, transform_indices = @transform_1, window_bounds = array<i64: 33, 96>}, {pipeline_mode = #tpu.pipeline_mode<synchronous>, transform_indices = @transform_2, window_bounds = array<i64: 33, 32>}, {pipeline_mode = #tpu.pipeline_mode<synchronous>, transform_indices = @transform_3, window_bounds = array<i64: 33, 128>}, {pipeline_mode = #tpu.pipeline_mode<synchronous>, transform_indices = @transform_4, window_bounds = array<i64: 129, 32>}, {pipeline_mode = #tpu.pipeline_mode<synchronous>, transform_indices = @transform_5, window_bounds = array<i64: 6, 32>}, {pipeline_mode = #tpu.pipeline_mode<synchronous>, transform_indices = @transform_6, window_bounds = array<i64: 16, 32>}]} {
    %c0 = arith.constant 0 : index
    %c0_0 = arith.constant 0 : index
    %0 = vector.load %arg1[%c0, %c0_0] : memref<16x32xf32, #tpu.memory_space<vmem>>, vector<16x32xf32>
    %c0_1 = arith.constant 0 : index
    %c0_2 = arith.constant 0 : index
    %1 = vector.load %arg2[%c0_1, %c0_2] : memref<33x96xf32, #tpu.memory_space<vmem>>, vector<32x96xf32>
    %c32 = arith.constant 32 : index
    %c0_3 = arith.constant 0 : index
    %2 = vector.load %arg2[%c32, %c0_3] : memref<33x96xf32, #tpu.memory_space<vmem>>, vector<1x96xf32>
    %c0_4 = arith.constant 0 : index
    %c0_5 = arith.constant 0 : index
    %3 = vector.load %arg3[%c0_4, %c0_5] : memref<33x32xf32, #tpu.memory_space<vmem>>, vector<32x32xf32>
    %c32_6 = arith.constant 32 : index
    %c0_7 = arith.constant 0 : index
    %4 = vector.load %arg3[%c32_6, %c0_7] : memref<33x32xf32, #tpu.memory_space<vmem>>, vector<1x32xf32>
    %c0_8 = arith.constant 0 : index
    %c0_9 = arith.constant 0 : index
    %5 = vector.load %arg4[%c0_8, %c0_9] : memref<33x128xf32, #tpu.memory_space<vmem>>, vector<32x128xf32>
    %c32_10 = arith.constant 32 : index
    %c0_11 = arith.constant 0 : index
    %6 = vector.load %arg4[%c32_10, %c0_11] : memref<33x128xf32, #tpu.memory_space<vmem>>, vector<1x128xf32>
    %c0_12 = arith.constant 0 : index
    %c0_13 = arith.constant 0 : index
    %7 = vector.load %arg5[%c0_12, %c0_13] : memref<129x32xf32, #tpu.memory_space<vmem>>, vector<128x32xf32>
    %c128 = arith.constant 128 : index
    %c0_14 = arith.constant 0 : index
    %8 = vector.load %arg5[%c128, %c0_14] : memref<129x32xf32, #tpu.memory_space<vmem>>, vector<1x32xf32>
    %c0_15 = arith.constant 0 : index
    %c0_16 = arith.constant 0 : index
    %9 = vector.load %arg6[%c0_15, %c0_16] : memref<6x32xf32, #tpu.memory_space<vmem>>, vector<1x32xf32>
    %c1 = arith.constant 1 : index
    %c0_17 = arith.constant 0 : index
    %10 = vector.load %arg6[%c1, %c0_17] : memref<6x32xf32, #tpu.memory_space<vmem>>, vector<1x32xf32>
    %c2 = arith.constant 2 : index
    %c0_18 = arith.constant 0 : index
    %11 = vector.load %arg6[%c2, %c0_18] : memref<6x32xf32, #tpu.memory_space<vmem>>, vector<1x32xf32>
    %c3 = arith.constant 3 : index
    %c0_19 = arith.constant 0 : index
    %12 = vector.load %arg6[%c3, %c0_19] : memref<6x32xf32, #tpu.memory_space<vmem>>, vector<1x32xf32>
    %c4 = arith.constant 4 : index
    %c0_20 = arith.constant 0 : index
    %13 = vector.load %arg6[%c4, %c0_20] : memref<6x32xf32, #tpu.memory_space<vmem>>, vector<1x32xf32>
    %c5 = arith.constant 5 : index
    %c0_21 = arith.constant 0 : index
    %14 = vector.load %arg6[%c5, %c0_21] : memref<6x32xf32, #tpu.memory_space<vmem>>, vector<1x32xf32>
    %cst = arith.constant dense<0.000000e+00> : vector<16x96xf32>
    %15 = tpu.matmul %0, %1, %cst {dimension_numbers = #tpu.dot_dimension_numbers<[1], [0], [0], [1], [0, 0, 1, 1], [], []>} : vector<16x32xf32>, vector<32x96xf32>, vector<16x96xf32> -> vector<16x96xf32>
    %16 = vector.broadcast %2 : vector<1x96xf32> to vector<16x96xf32>
    %17 = arith.addf %15, %16 : vector<16x96xf32>
    %18 = tpu.iota {dimensions = array<i32: 0>} : vector<16x16xi32>
    %19 = tpu.iota {dimensions = array<i32: 1>} : vector<16x16xi32>
    %c2_i32 = arith.constant 2 : i32
    %c0_i32 = arith.constant 0 : i32
    %20 = arith.cmpi eq, %c2_i32, %c0_i32 : i32
    %c1_i32 = arith.constant 1 : i32
    %21 = arith.select %20, %c1_i32, %c2_i32 : i32
    %22 = vector.broadcast %21 : i32 to vector<16x16xi32>
    %23 = arith.remsi %18, %22 : vector<16x16xi32>
    %c0_i32_22 = arith.constant 0 : i32
    %24 = vector.broadcast %c0_i32_22 : i32 to vector<16x16xi32>
    %25 = arith.cmpi ne, %23, %24 : vector<16x16xi32>
    %c0_i32_23 = arith.constant 0 : i32
    %26 = vector.broadcast %c0_i32_23 : i32 to vector<16x16xi32>
    %27 = arith.cmpi slt, %23, %26 : vector<16x16xi32>
    %c0_i32_24 = arith.constant 0 : i32
    %28 = arith.cmpi slt, %21, %c0_i32_24 : i32
    %29 = vector.broadcast %28 : i1 to vector<16x16xi1>
    %30 = vector.broadcast %29 : vector<16x16xi1> to vector<16x16xi1>
    %31 = arith.xori %27, %30 : vector<16x16xi1>
    %32 = arith.andi %31, %25 : vector<16x16xi1>
    %33 = vector.broadcast %21 : i32 to vector<16x16xi32>
    %34 = arith.addi %23, %33 : vector<16x16xi32>
    %35 = arith.select %32, %34, %23 : vector<16x16xi1>, vector<16x16xi32>
    %c2_i32_25 = arith.constant 2 : i32
    %c0_i32_26 = arith.constant 0 : i32
    %36 = arith.cmpi eq, %c2_i32_25, %c0_i32_26 : i32
    %c1_i32_27 = arith.constant 1 : i32
    %37 = arith.select %36, %c1_i32_27, %c2_i32_25 : i32
    %38 = vector.broadcast %37 : i32 to vector<16x16xi32>
    %39 = arith.remsi %19, %38 : vector<16x16xi32>
    %c0_i32_28 = arith.constant 0 : i32
    %40 = vector.broadcast %c0_i32_28 : i32 to vector<16x16xi32>
    %41 = arith.cmpi ne, %39, %40 : vector<16x16xi32>
    %c0_i32_29 = arith.constant 0 : i32
    %42 = vector.broadcast %c0_i32_29 : i32 to vector<16x16xi32>
    %43 = arith.cmpi slt, %39, %42 : vector<16x16xi32>
    %c0_i32_30 = arith.constant 0 : i32
    %44 = arith.cmpi slt, %37, %c0_i32_30 : i32
    %45 = vector.broadcast %44 : i1 to vector<16x16xi1>
    %46 = vector.broadcast %45 : vector<16x16xi1> to vector<16x16xi1>
    %47 = arith.xori %43, %46 : vector<16x16xi1>
    %48 = arith.andi %47, %41 : vector<16x16xi1>
    %49 = vector.broadcast %37 : i32 to vector<16x16xi32>
    %50 = arith.addi %39, %49 : vector<16x16xi32>
    %51 = arith.select %48, %50, %39 : vector<16x16xi1>, vector<16x16xi32>
    %52 = arith.cmpi eq, %35, %51 : vector<16x16xi32>
    %cst_31 = arith.constant 0.000000e+00 : f32
    %cst_32 = arith.constant -1.000000e+30 : f32
    %53 = vector.broadcast %cst_31 : f32 to vector<16x16xf32>
    %54 = vector.broadcast %cst_32 : f32 to vector<16x16xf32>
    %55 = arith.select %52, %53, %54 : vector<16x16xi1>, vector<16x16xf32>
    %56 = vector.extract_strided_slice %17 {offsets = [0, 0], sizes = [16, 8], strides = [1, 1]} : vector<16x96xf32> to vector<16x8xf32>
    %57 = vector.extract_strided_slice %17 {offsets = [0, 32], sizes = [16, 8], strides = [1, 1]} : vector<16x96xf32> to vector<16x8xf32>
    %58 = vector.extract_strided_slice %17 {offsets = [0, 64], sizes = [16, 8], strides = [1, 1]} : vector<16x96xf32> to vector<16x8xf32>
    %cst_33 = arith.constant dense<0.000000e+00> : vector<16x16xf32>
    %59 = tpu.matmul %56, %57, %cst_33 {dimension_numbers = #tpu.dot_dimension_numbers<[1], [1], [0], [0], [0, 0, 1, 0], [], []>} : vector<16x8xf32>, vector<16x8xf32>, vector<16x16xf32> -> vector<16x16xf32>
    %cst_34 = arith.constant 0.353553385 : f32
    %60 = vector.broadcast %cst_34 : f32 to vector<16x16xf32>
    %61 = arith.mulf %59, %60 : vector<16x16xf32>
    %62 = arith.addf %61, %55 : vector<16x16xf32>
    %cst_35 = arith.constant dense<0xFF800000> : vector<16xf32>
    %63 = vector.multi_reduction <maximumf>, %62, %cst_35 [1] : vector<16x16xf32> to vector<16xf32>
    %64 = vector.shape_cast %63 : vector<16xf32> to vector<16x1xf32>
    %65 = vector.broadcast %64 : vector<16x1xf32> to vector<16x16xf32>
    %66 = arith.subf %62, %65 : vector<16x16xf32>
    %67 = math.exp %66 : vector<16x16xf32>
    %cst_36 = arith.constant dense<0.000000e+00> : vector<16xf32>
    %68 = vector.multi_reduction <add>, %67, %cst_36 [1] : vector<16x16xf32> to vector<16xf32>
    %69 = vector.shape_cast %68 : vector<16xf32> to vector<16x1xf32>
    %70 = tpu.reciprocal %69 : vector<16x1xf32> -> vector<16x1xf32>
    %71 = vector.broadcast %70 : vector<16x1xf32> to vector<16x16xf32>
    %72 = arith.mulf %67, %71 : vector<16x16xf32>
    %cst_37 = arith.constant dense<0.000000e+00> : vector<16x8xf32>
    %73 = tpu.matmul %72, %58, %cst_37 {dimension_numbers = #tpu.dot_dimension_numbers<[1], [0], [0], [1], [0, 0, 1, 1], [], []>} : vector<16x16xf32>, vector<16x8xf32>, vector<16x8xf32> -> vector<16x8xf32>
    %74 = vector.extract_strided_slice %17 {offsets = [0, 8], sizes = [16, 8], strides = [1, 1]} : vector<16x96xf32> to vector<16x8xf32>
    %75 = vector.extract_strided_slice %17 {offsets = [0, 40], sizes = [16, 8], strides = [1, 1]} : vector<16x96xf32> to vector<16x8xf32>
    %76 = vector.extract_strided_slice %17 {offsets = [0, 72], sizes = [16, 8], strides = [1, 1]} : vector<16x96xf32> to vector<16x8xf32>
    %cst_38 = arith.constant dense<0.000000e+00> : vector<16x16xf32>
    %77 = tpu.matmul %74, %75, %cst_38 {dimension_numbers = #tpu.dot_dimension_numbers<[1], [1], [0], [0], [0, 0, 1, 0], [], []>} : vector<16x8xf32>, vector<16x8xf32>, vector<16x16xf32> -> vector<16x16xf32>
    %cst_39 = arith.constant 0.353553385 : f32
    %78 = vector.broadcast %cst_39 : f32 to vector<16x16xf32>
    %79 = arith.mulf %77, %78 : vector<16x16xf32>
    %80 = arith.addf %79, %55 : vector<16x16xf32>
    %cst_40 = arith.constant dense<0xFF800000> : vector<16xf32>
    %81 = vector.multi_reduction <maximumf>, %80, %cst_40 [1] : vector<16x16xf32> to vector<16xf32>
    %82 = vector.shape_cast %81 : vector<16xf32> to vector<16x1xf32>
    %83 = vector.broadcast %82 : vector<16x1xf32> to vector<16x16xf32>
    %84 = arith.subf %80, %83 : vector<16x16xf32>
    %85 = math.exp %84 : vector<16x16xf32>
    %cst_41 = arith.constant dense<0.000000e+00> : vector<16xf32>
    %86 = vector.multi_reduction <add>, %85, %cst_41 [1] : vector<16x16xf32> to vector<16xf32>
    %87 = vector.shape_cast %86 : vector<16xf32> to vector<16x1xf32>
    %88 = tpu.reciprocal %87 : vector<16x1xf32> -> vector<16x1xf32>
    %89 = vector.broadcast %88 : vector<16x1xf32> to vector<16x16xf32>
    %90 = arith.mulf %85, %89 : vector<16x16xf32>
    %cst_42 = arith.constant dense<0.000000e+00> : vector<16x8xf32>
    %91 = tpu.matmul %90, %76, %cst_42 {dimension_numbers = #tpu.dot_dimension_numbers<[1], [0], [0], [1], [0, 0, 1, 1], [], []>} : vector<16x16xf32>, vector<16x8xf32>, vector<16x8xf32> -> vector<16x8xf32>
    %92 = vector.extract_strided_slice %17 {offsets = [0, 16], sizes = [16, 8], strides = [1, 1]} : vector<16x96xf32> to vector<16x8xf32>
    %93 = vector.extract_strided_slice %17 {offsets = [0, 48], sizes = [16, 8], strides = [1, 1]} : vector<16x96xf32> to vector<16x8xf32>
    %94 = vector.extract_strided_slice %17 {offsets = [0, 80], sizes = [16, 8], strides = [1, 1]} : vector<16x96xf32> to vector<16x8xf32>
    %cst_43 = arith.constant dense<0.000000e+00> : vector<16x16xf32>
    %95 = tpu.matmul %92, %93, %cst_43 {dimension_numbers = #tpu.dot_dimension_numbers<[1], [1], [0], [0], [0, 0, 1, 0], [], []>} : vector<16x8xf32>, vector<16x8xf32>, vector<16x16xf32> -> vector<16x16xf32>
    %cst_44 = arith.constant 0.353553385 : f32
    %96 = vector.broadcast %cst_44 : f32 to vector<16x16xf32>
    %97 = arith.mulf %95, %96 : vector<16x16xf32>
    %98 = arith.addf %97, %55 : vector<16x16xf32>
    %cst_45 = arith.constant dense<0xFF800000> : vector<16xf32>
    %99 = vector.multi_reduction <maximumf>, %98, %cst_45 [1] : vector<16x16xf32> to vector<16xf32>
    %100 = vector.shape_cast %99 : vector<16xf32> to vector<16x1xf32>
    %101 = vector.broadcast %100 : vector<16x1xf32> to vector<16x16xf32>
    %102 = arith.subf %98, %101 : vector<16x16xf32>
    %103 = math.exp %102 : vector<16x16xf32>
    %cst_46 = arith.constant dense<0.000000e+00> : vector<16xf32>
    %104 = vector.multi_reduction <add>, %103, %cst_46 [1] : vector<16x16xf32> to vector<16xf32>
    %105 = vector.shape_cast %104 : vector<16xf32> to vector<16x1xf32>
    %106 = tpu.reciprocal %105 : vector<16x1xf32> -> vector<16x1xf32>
    %107 = vector.broadcast %106 : vector<16x1xf32> to vector<16x16xf32>
    %108 = arith.mulf %103, %107 : vector<16x16xf32>
    %cst_47 = arith.constant dense<0.000000e+00> : vector<16x8xf32>
    %109 = tpu.matmul %108, %94, %cst_47 {dimension_numbers = #tpu.dot_dimension_numbers<[1], [0], [0], [1], [0, 0, 1, 1], [], []>} : vector<16x16xf32>, vector<16x8xf32>, vector<16x8xf32> -> vector<16x8xf32>
    %110 = vector.extract_strided_slice %17 {offsets = [0, 24], sizes = [16, 8], strides = [1, 1]} : vector<16x96xf32> to vector<16x8xf32>
    %111 = vector.extract_strided_slice %17 {offsets = [0, 56], sizes = [16, 8], strides = [1, 1]} : vector<16x96xf32> to vector<16x8xf32>
    %112 = vector.extract_strided_slice %17 {offsets = [0, 88], sizes = [16, 8], strides = [1, 1]} : vector<16x96xf32> to vector<16x8xf32>
    %cst_48 = arith.constant dense<0.000000e+00> : vector<16x16xf32>
    %113 = tpu.matmul %110, %111, %cst_48 {dimension_numbers = #tpu.dot_dimension_numbers<[1], [1], [0], [0], [0, 0, 1, 0], [], []>} : vector<16x8xf32>, vector<16x8xf32>, vector<16x16xf32> -> vector<16x16xf32>
    %cst_49 = arith.constant 0.353553385 : f32
    %114 = vector.broadcast %cst_49 : f32 to vector<16x16xf32>
    %115 = arith.mulf %113, %114 : vector<16x16xf32>
    %116 = arith.addf %115, %55 : vector<16x16xf32>
    %cst_50 = arith.constant dense<0xFF800000> : vector<16xf32>
    %117 = vector.multi_reduction <maximumf>, %116, %cst_50 [1] : vector<16x16xf32> to vector<16xf32>
    %118 = vector.shape_cast %117 : vector<16xf32> to vector<16x1xf32>
    %119 = vector.broadcast %118 : vector<16x1xf32> to vector<16x16xf32>
    %120 = arith.subf %116, %119 : vector<16x16xf32>
    %121 = math.exp %120 : vector<16x16xf32>
    %cst_51 = arith.constant dense<0.000000e+00> : vector<16xf32>
    %122 = vector.multi_reduction <add>, %121, %cst_51 [1] : vector<16x16xf32> to vector<16xf32>
    %123 = vector.shape_cast %122 : vector<16xf32> to vector<16x1xf32>
    %124 = tpu.reciprocal %123 : vector<16x1xf32> -> vector<16x1xf32>
    %125 = vector.broadcast %124 : vector<16x1xf32> to vector<16x16xf32>
    %126 = arith.mulf %121, %125 : vector<16x16xf32>
    %cst_52 = arith.constant dense<0.000000e+00> : vector<16x8xf32>
    %127 = tpu.matmul %126, %112, %cst_52 {dimension_numbers = #tpu.dot_dimension_numbers<[1], [0], [0], [1], [0, 0, 1, 1], [], []>} : vector<16x16xf32>, vector<16x8xf32>, vector<16x8xf32> -> vector<16x8xf32>
    %128 = tpu.concatenate %73, %91, %109, %127 in 1 : vector<16x8xf32>, vector<16x8xf32>, vector<16x8xf32>, vector<16x8xf32> -> vector<16x32xf32>
    %cst_53 = arith.constant dense<0.000000e+00> : vector<16x32xf32>
    %129 = tpu.matmul %128, %3, %cst_53 {dimension_numbers = #tpu.dot_dimension_numbers<[1], [0], [0], [1], [0, 0, 1, 1], [], []>} : vector<16x32xf32>, vector<32x32xf32>, vector<16x32xf32> -> vector<16x32xf32>
    %130 = vector.broadcast %4 : vector<1x32xf32> to vector<16x32xf32>
    %131 = arith.addf %129, %130 : vector<16x32xf32>
    %132 = arith.addf %0, %131 : vector<16x32xf32>
    %cst_54 = arith.constant dense<0.000000e+00> : vector<16xf32>
    %133 = vector.multi_reduction <add>, %132, %cst_54 [1] : vector<16x32xf32> to vector<16xf32>
    %134 = vector.shape_cast %133 : vector<16xf32> to vector<16x1xf32>
    %cst_55 = arith.constant 3.200000e+01 : f32
    %135 = vector.broadcast %cst_55 : f32 to vector<16x1xf32>
    %136 = arith.divf %134, %135 : vector<16x1xf32>
    %137 = vector.broadcast %136 : vector<16x1xf32> to vector<16x32xf32>
    %138 = arith.subf %132, %137 : vector<16x32xf32>
    %139 = arith.mulf %138, %138 : vector<16x32xf32>
    %cst_56 = arith.constant dense<0.000000e+00> : vector<16xf32>
    %140 = vector.multi_reduction <add>, %139, %cst_56 [1] : vector<16x32xf32> to vector<16xf32>
    %141 = vector.shape_cast %140 : vector<16xf32> to vector<16x1xf32>
    %cst_57 = arith.constant 3.200000e+01 : f32
    %142 = vector.broadcast %cst_57 : f32 to vector<16x1xf32>
    %143 = arith.divf %141, %142 : vector<16x1xf32>
    %144 = vector.broadcast %136 : vector<16x1xf32> to vector<16x32xf32>
    %145 = arith.subf %132, %144 : vector<16x32xf32>
    %cst_58 = arith.constant 9.99999974E-6 : f32
    %146 = vector.broadcast %cst_58 : f32 to vector<16x1xf32>
    %147 = arith.addf %143, %146 : vector<16x1xf32>
    %148 = math.rsqrt %147 : vector<16x1xf32>
    %149 = vector.broadcast %148 : vector<16x1xf32> to vector<16x32xf32>
    %150 = arith.mulf %145, %149 : vector<16x32xf32>
    %151 = vector.broadcast %9 : vector<1x32xf32> to vector<16x32xf32>
    %152 = arith.mulf %150, %151 : vector<16x32xf32>
    %153 = vector.broadcast %10 : vector<1x32xf32> to vector<16x32xf32>
    %154 = arith.addf %152, %153 : vector<16x32xf32>
    %155 = arith.addf %0, %154 : vector<16x32xf32>
    %cst_59 = arith.constant dense<0.000000e+00> : vector<16xf32>
    %156 = vector.multi_reduction <add>, %155, %cst_59 [1] : vector<16x32xf32> to vector<16xf32>
    %157 = vector.shape_cast %156 : vector<16xf32> to vector<16x1xf32>
    %cst_60 = arith.constant 3.200000e+01 : f32
    %158 = vector.broadcast %cst_60 : f32 to vector<16x1xf32>
    %159 = arith.divf %157, %158 : vector<16x1xf32>
    %160 = vector.broadcast %159 : vector<16x1xf32> to vector<16x32xf32>
    %161 = arith.subf %155, %160 : vector<16x32xf32>
    %162 = arith.mulf %161, %161 : vector<16x32xf32>
    %cst_61 = arith.constant dense<0.000000e+00> : vector<16xf32>
    %163 = vector.multi_reduction <add>, %162, %cst_61 [1] : vector<16x32xf32> to vector<16xf32>
    %164 = vector.shape_cast %163 : vector<16xf32> to vector<16x1xf32>
    %cst_62 = arith.constant 3.200000e+01 : f32
    %165 = vector.broadcast %cst_62 : f32 to vector<16x1xf32>
    %166 = arith.divf %164, %165 : vector<16x1xf32>
    %167 = vector.broadcast %159 : vector<16x1xf32> to vector<16x32xf32>
    %168 = arith.subf %155, %167 : vector<16x32xf32>
    %cst_63 = arith.constant 9.99999974E-6 : f32
    %169 = vector.broadcast %cst_63 : f32 to vector<16x1xf32>
    %170 = arith.addf %166, %169 : vector<16x1xf32>
    %171 = math.rsqrt %170 : vector<16x1xf32>
    %172 = vector.broadcast %171 : vector<16x1xf32> to vector<16x32xf32>
    %173 = arith.mulf %168, %172 : vector<16x32xf32>
    %174 = vector.broadcast %11 : vector<1x32xf32> to vector<16x32xf32>
    %175 = arith.mulf %173, %174 : vector<16x32xf32>
    %176 = vector.broadcast %12 : vector<1x32xf32> to vector<16x32xf32>
    %177 = arith.addf %175, %176 : vector<16x32xf32>
    %cst_64 = arith.constant dense<0.000000e+00> : vector<16x128xf32>
    %178 = tpu.matmul %177, %5, %cst_64 {dimension_numbers = #tpu.dot_dimension_numbers<[1], [0], [0], [1], [0, 0, 1, 1], [], []>} : vector<16x32xf32>, vector<32x128xf32>, vector<16x128xf32> -> vector<16x128xf32>
    %179 = vector.broadcast %6 : vector<1x128xf32> to vector<16x128xf32>
    %180 = arith.addf %178, %179 : vector<16x128xf32>
    %cst_65 = arith.constant 0.000000e+00 : f32
    %181 = vector.broadcast %cst_65 : f32 to vector<16x128xf32>
    %182 = arith.maximumf %180, %181 : vector<16x128xf32>
    %cst_66 = arith.constant dense<0.000000e+00> : vector<16x32xf32>
    %183 = tpu.matmul %182, %7, %cst_66 {dimension_numbers = #tpu.dot_dimension_numbers<[1], [0], [0], [1], [0, 0, 1, 1], [], []>} : vector<16x128xf32>, vector<128x32xf32>, vector<16x32xf32> -> vector<16x32xf32>
    %184 = vector.broadcast %8 : vector<1x32xf32> to vector<16x32xf32>
    %185 = arith.addf %183, %184 : vector<16x32xf32>
    %186 = arith.addf %177, %185 : vector<16x32xf32>
    %cst_67 = arith.constant dense<0.000000e+00> : vector<16xf32>
    %187 = vector.multi_reduction <add>, %186, %cst_67 [1] : vector<16x32xf32> to vector<16xf32>
    %188 = vector.shape_cast %187 : vector<16xf32> to vector<16x1xf32>
    %cst_68 = arith.constant 3.200000e+01 : f32
    %189 = vector.broadcast %cst_68 : f32 to vector<16x1xf32>
    %190 = arith.divf %188, %189 : vector<16x1xf32>
    %191 = vector.broadcast %190 : vector<16x1xf32> to vector<16x32xf32>
    %192 = arith.subf %186, %191 : vector<16x32xf32>
    %193 = arith.mulf %192, %192 : vector<16x32xf32>
    %cst_69 = arith.constant dense<0.000000e+00> : vector<16xf32>
    %194 = vector.multi_reduction <add>, %193, %cst_69 [1] : vector<16x32xf32> to vector<16xf32>
    %195 = vector.shape_cast %194 : vector<16xf32> to vector<16x1xf32>
    %cst_70 = arith.constant 3.200000e+01 : f32
    %196 = vector.broadcast %cst_70 : f32 to vector<16x1xf32>
    %197 = arith.divf %195, %196 : vector<16x1xf32>
    %198 = vector.broadcast %190 : vector<16x1xf32> to vector<16x32xf32>
    %199 = arith.subf %186, %198 : vector<16x32xf32>
    %cst_71 = arith.constant 9.99999974E-6 : f32
    %200 = vector.broadcast %cst_71 : f32 to vector<16x1xf32>
    %201 = arith.addf %197, %200 : vector<16x1xf32>
    %202 = math.rsqrt %201 : vector<16x1xf32>
    %203 = vector.broadcast %202 : vector<16x1xf32> to vector<16x32xf32>
    %204 = arith.mulf %199, %203 : vector<16x32xf32>
    %205 = vector.broadcast %13 : vector<1x32xf32> to vector<16x32xf32>
    %206 = arith.mulf %204, %205 : vector<16x32xf32>
    %207 = vector.broadcast %14 : vector<1x32xf32> to vector<16x32xf32>
    %208 = arith.addf %206, %207 : vector<16x32xf32>
    %c0_72 = arith.constant 0 : index
    %c0_73 = arith.constant 0 : index
    %209 = vector.load %arg7[%c0_72, %c0_73] : memref<16x32xf32, #tpu.memory_space<vmem>>, vector<16x32xf32>
    tpu.vector_store %arg7[%c0_72, %c0_73], %208 {strides = array<i32>} : memref<16x32xf32, #tpu.memory_space<vmem>>, vector<16x32xf32>,
    return
  }
  func.func @transform_0(%arg0: i32) -> (i32, i32) {
    %c0_i32 = arith.constant 0 : i32
    %c0_i32_0 = arith.constant 0 : i32
    %c0_i32_1 = arith.constant 0 : i32
    return %c0_i32, %c0_i32_0 : i32, i32
  }
  func.func @transform_1(%arg0: i32) -> (i32, i32) {
    %c0_i32 = arith.constant 0 : i32
    %c0_i32_0 = arith.constant 0 : i32
    %c0_i32_1 = arith.constant 0 : i32
    return %c0_i32, %c0_i32_0 : i32, i32
  }
  func.func @transform_2(%arg0: i32) -> (i32, i32) {
    %c0_i32 = arith.constant 0 : i32
    %c0_i32_0 = arith.constant 0 : i32
    %c0_i32_1 = arith.constant 0 : i32
    return %c0_i32, %c0_i32_0 : i32, i32
  }
  func.func @transform_3(%arg0: i32) -> (i32, i32) {
    %c0_i32 = arith.constant 0 : i32
    %c0_i32_0 = arith.constant 0 : i32
    %c0_i32_1 = arith.constant 0 : i32
    return %c0_i32, %c0_i32_0 : i32, i32
  }
  func.func @transform_4(%arg0: i32) -> (i32, i32) {
    %c0_i32 = arith.constant 0 : i32
    %c0_i32_0 = arith.constant 0 : i32
    %c0_i32_1 = arith.constant 0 : i32
    return %c0_i32, %c0_i32_0 : i32, i32
  }
  func.func @transform_5(%arg0: i32) -> (i32, i32) {
    %c0_i32 = arith.constant 0 : i32
    %c0_i32_0 = arith.constant 0 : i32
    %c0_i32_1 = arith.constant 0 : i32
    return %c0_i32, %c0_i32_0 : i32, i32
  }
  func.func @transform_6(%arg0: i32) -> (i32, i32) {
    %c0_i32 = arith.constant 0 : i32
    %c0_i32_0 = arith.constant 0 : i32
    %c0_i32_1 = arith.constant 0 : i32
    return %c0_i32, %c0_i32_0 : i32, i32
  }
}

</mosaic_0001>

<llo_original>
// kernel: tpu_custom_call.1
$region0: #{tpu_custom_call.1}
  #allocation0 [shape = 'u32[]', space=smem, size = 0x4, offset = 0x4, fixed_abs, tag = 'smem constant byte address 0x4 - core index']
  #allocation1 [shape = 'u32[144,128]{1,0:T(1,128)}', space=vmem, size = 0x12000, scoped, tag = 'internal scratch']
  %s0 = inlined_call_operand.vmem [shape: f32[16,32], index: 0, kind: input, shape index: {}]
  %s1 = inlined_call_operand.vmem [shape: f32[33,96], index: 1, kind: input, shape index: {}]
  %s2 = inlined_call_operand.vmem [shape: f32[33,32], index: 2, kind: input, shape index: {}]
  %s3 = inlined_call_operand.vmem [shape: f32[33,128], index: 3, kind: input, shape index: {}]
  %s4 = inlined_call_operand.vmem [shape: f32[129,32], index: 4, kind: input, shape index: {}]
  %s5 = inlined_call_operand.vmem [shape: f32[6,32], index: 5, kind: input, shape index: {}]
  %s6 = inlined_call_operand.hbm [shape: f32[16,32], index: 6, kind: output, shape index: {}]
  %s7 = sld [smem:[#allocation0]]
  $region34: #{tpu_custom_call.1} parent=0
    _
  %s9 = ssub.s32 1, %s7
  %s10 = scalar_select 0, %s9, %s7
  $region1: #{tpu_custom_call.1} parent=0
    #allocation2 [shape = 'u8[8192]{0}', space=vmem, size = 0x2000, scoped, tag = 'output window, operand 0, single buffered']
    #allocation3 [shape = 's32[1]{0}', space=sflag, size = 0x4, scoped, tag = 'scoped memory for tpu_custom_call.1']
    %11 = vsyncpa [#allocation3], 0
    // Predicated region
    $region2: #{tpu_custom_call.1} parent=1 // pred_check
      _
    $region3: #{tpu_custom_call.1} parent=1 // pred_check_branch
      %13 = sbr.rel (0) target = $region5
    $region4: #{tpu_custom_call.1} parent=1 // pred_region
      _
    $region5: #{tpu_custom_call.1} parent=1 // pred_fallthru
      _
    // Predicated region
    $region6: #{tpu_custom_call.1} parent=1 // pred_check
      _
    $region7: #{tpu_custom_call.1} parent=1 // pred_check_branch
      %15 = sbr.rel (0) target = $region9
    $region8: #{tpu_custom_call.1} parent=1 // pred_region
      _
    $region9: #{tpu_custom_call.1} parent=1 // pred_fallthru
      _
    // Predicated region
    $region10: #{tpu_custom_call.1} parent=1 // pred_check
      _
    $region11: #{tpu_custom_call.1} parent=1 // pred_check_branch
      %17 = sbr.rel (0) target = $region13
    $region12: #{tpu_custom_call.1} parent=1 // pred_region
      _
    $region13: #{tpu_custom_call.1} parent=1 // pred_fallthru
      _
    // Predicated region
    $region14: #{tpu_custom_call.1} parent=1 // pred_check
      _
    $region15: #{tpu_custom_call.1} parent=1 // pred_check_branch
      %19 = sbr.rel (0) target = $region17
    $region16: #{tpu_custom_call.1} parent=1 // pred_region
      _
    $region17: #{tpu_custom_call.1} parent=1 // pred_fallthru
      _
    // Predicated region
    $region18: #{tpu_custom_call.1} parent=1 // pred_check
      _
    $region19: #{tpu_custom_call.1} parent=1 // pred_check_branch
      %21 = sbr.rel (0) target = $region21
    $region20: #{tpu_custom_call.1} parent=1 // pred_region
      _
    $region21: #{tpu_custom_call.1} parent=1 // pred_fallthru
      _
    // Predicated region
    $region22: #{tpu_custom_call.1} parent=1 // pred_check
      _
    $region23: #{tpu_custom_call.1} parent=1 // pred_check_branch
      %23 = sbr.rel (0) target = $region25
    $region24: #{tpu_custom_call.1} parent=1 // pred_region
      _
    $region25: #{tpu_custom_call.1} parent=1 // pred_fallthru
      _
    %v24 = vld [vmem:[%s0] sm:$0xff]
    %v25 = vld [vmem:[%s0 + $0x8] sm:$0xff]
    %v26 = vld [vmem:[%s1] sm:$0xff]
    %v27 = vld [vmem:[%s1 + $0x8] sm:$0xff]
    %v28 = vld [vmem:[%s1 + $0x10] sm:$0xff]
    %v29 = vld [vmem:[%s1 + $0x18] sm:$0xff]
    %v30 = vld [vmem:[%s1 + $0x20] sm:$0x1]
    %v31 = vld [vmem:[%s2] sm:$0xff]
    %v32 = vld [vmem:[%s2 + $0x8] sm:$0xff]
    %v33 = vld [vmem:[%s2 + $0x10] sm:$0xff]
    %v34 = vld [vmem:[%s2 + $0x18] sm:$0xff]
    %v35 = vld [vmem:[%s2 + $0x20] sm:$0x1]
    %v36 = vld [vmem:[%s3] sm:$0xff]
    %v37 = vld [vmem:[%s3 + $0x8] sm:$0xff]
    %v38 = vld [vmem:[%s3 + $0x10] sm:$0xff]
    %v39 = vld [vmem:[%s3 + $0x18] sm:$0xff]
    %v40 = vld [vmem:[%s3 + $0x20] sm:$0x1]
    %v41 = vld [vmem:[%s4] sm:$0xff]
    %v42 = vld [vmem:[%s4 + $0x8] sm:$0xff]
    %v43 = vld [vmem:[%s4 + $0x10] sm:$0xff]
    %v44 = vld [vmem:[%s4 + $0x18] sm:$0xff]
    %v45 = vld [vmem:[%s4 + $0x20] sm:$0xff]
    %v46 = vld [vmem:[%s4 + $0x28] sm:$0xff]
    %v47 = vld [vmem:[%s4 + $0x30] sm:$0xff]
    %v48 = vld [vmem:[%s4 + $0x38] sm:$0xff]
    %v49 = vld [vmem:[%s4 + $0x40] sm:$0xff]
    %v50 = vld [vmem:[%s4 + $0x48] sm:$0xff]
    %v51 = vld [vmem:[%s4 + $0x50] sm:$0xff]
    %v52 = vld [vmem:[%s4 + $0x58] sm:$0xff]
    %v53 = vld [vmem:[%s4 + $0x60] sm:$0xff]
    %v54 = vld [vmem:[%s4 + $0x68] sm:$0xff]
    %v55 = vld [vmem:[%s4 + $0x70] sm:$0xff]
    %v56 = vld [vmem:[%s4 + $0x78] sm:$0xff]
    %v57 = vld [vmem:[%s4 + $0x80] sm:$0x1]
    %v58 = vld [vmem:[%s5] sm:$0x1]
    %v59 = vld [vmem:[%s5 + $0x1] sm:$0x1]
    %v60 = vld [vmem:[%s5 + $0x2] sm:$0x1]
    %v61 = vld [vmem:[%s5 + $0x3] sm:$0x1]
    %v62 = vld [vmem:[%s5 + $0x4] sm:$0x1]
    %v63 = vld [vmem:[%s5 + $0x5] sm:$0x1]
    %v64 = vlaneseq
    %v65 = vshrl.u32 %v64, 7
    %v66 = vsub.s32 0, %v65
    %v67 = vrot.slane %v30, %v66
    %vm68 = vcmask 261120
    %v70 = vsel %vm68, %v24, 0
    %v73 = vsel %vm68, %v25, 0
    %75 = vmatprep.subr.mxu0 0.0
    %76 = vmatpush1.msra.mxu0 0.0
    %77 = vmatprep.subr.mxu0 0.0
    %78 = vmatpush1.msra.mxu0 0.0
    %79 = vmatprep.subr.mxu0 0.0
    %80 = vmatpush1.msra.mxu0 0.0
    %81 = vmatprep.subr.mxu0 0.0
    %82 = vmatpush1.msra.mxu0 0.0
    %83 = vmatprep.subr.mxu0 0.0
    %84 = vmatpush1.msra.mxu0 0.0
    %85 = vmatprep.subr.mxu0 0.0
    %86 = vmatpush1.msra.mxu0 0.0
    %87 = vmatprep.subr.mxu0 0.0
    %88 = vmatpush1.msra.mxu0 0.0
    %89 = vmatprep.subr.mxu0 0.0
    %90 = vmatpush1.msra.mxu0 0.0
    %91 = vmatprep.subr.mxu0 0.0
    %92 = vmatpush1.msra.mxu0 0.0
    %93 = vmatprep.subr.mxu0 0.0
    %94 = vmatpush1.msra.mxu0 0.0
    %95 = vmatprep.subr.mxu0 0.0
    %96 = vmatpush1.msra.mxu0 0.0
    %97 = vmatprep.subr.mxu0 0.0
    %98 = vmatpush1.msra.mxu0 0.0
    %99 = vmatprep.subr.mxu0 0.0
    %100 = vmatpush1.msra.mxu0 %v29
    %101 = vmatprep.subr.mxu0 0.0
    %102 = vmatpush1.msra.mxu0 %v28
    %103 = vmatprep.subr.mxu0 0.0
    %104 = vmatpush1.msra.mxu0 %v27
    %105 = vmatprep.subr.mxu0 0.0
    %106 = vmatpush1.msra.mxu0 %v26
    %107 = vmatprep.subr.mxu0 0.0
    %108 = vmatpush2.msra.mxu0 0.0
    %109 = vmatprep.subr.mxu0 0.0
    %110 = vmatpush2.msra.mxu0 0.0
    %111 = vmatprep.subr.mxu0 0.0
    %112 = vmatpush2.msra.mxu0 0.0
    %113 = vmatprep.subr.mxu0 0.0
    %114 = vmatpush2.msra.mxu0 0.0
    %115 = vmatprep.subr.mxu0 0.0
    %116 = vmatpush2.msra.mxu0 0.0
    %117 = vmatprep.subr.mxu0 0.0
    %118 = vmatpush2.msra.mxu0 0.0
    %119 = vmatprep.subr.mxu0 0.0
    %120 = vmatpush2.msra.mxu0 0.0
    %121 = vmatprep.subr.mxu0 0.0
    %122 = vmatpush2.msra.mxu0 0.0
    %123 = vmatprep.subr.mxu0 0.0
    %124 = vmatpush2.msra.mxu0 0.0
    %125 = vmatprep.subr.mxu0 0.0
    %126 = vmatpush2.msra.mxu0 0.0
    %127 = vmatprep.subr.mxu0 0.0
    %128 = vmatpush2.msra.mxu0 0.0
    %129 = vmatprep.subr.mxu0 0.0
    %130 = vmatpush2.msra.mxu0 0.0
    %131 = vmatprep.subr.mxu0 0.0
    %132 = vmatpush2.msra.mxu0 0.0
    %133 = vmatprep.subr.mxu0 0.0
    %134 = vmatpush2.msra.mxu0 0.0
    %135 = vmatprep.subr.mxu0 0.0
    %136 = vmatpush2.msra.mxu0 0.0
    %137 = vmatprep.subr.mxu0 0.0
    %138 = vmatpush2.msra.mxu0 0.0
    %139 = vmatprep.mubr.f32.mxu0 0.0
    %140 = vmatmul.mubr.f32.gmra.mxu0 %v70
    %v141 = vpop.f32.mrf.mxu0
    %v142 = vadd.f32 %v67, %v141
    %v143 = vpop.f32.mrf.mxu0
    %144 = vmatprep.mubr.f32.mxu0 0.0
    %145 = vmatmul.mubr.f32.gmra.mxu0 %v73
    %v146 = vpop.f32.mrf.mxu0
    %v147 = vadd.f32 %v67, %v146
    %v148 = vpop.f32.mrf.mxu0
    %149 = vdwg.mxu0
    %v150 = vlaneseq
    %v151 = vshrl.u32 %v150, 7
    %v152 = vadd.s32 %v151, 8
    %v153 = vlaneseq
    %v154 = vand.u32 %v153, 127
    %vm155 = vcmp.lt.s32.totalorder %v151, 0
    %v156 = vsub.s32 0, %v151
    %v157 = vsel %vm155, %v156, %v151
    %v158 = vshrl.u32 %v157, 1
    %v159 = vand.u32 %v157, 1
    %v160 = vsub.s32 0, %v159
    %v161 = vsel %vm155, %v160, %v159
    %vm162 = vcmp.lt.s32.totalorder %v152, 0
    %v163 = vsub.s32 0, %v152
    %v164 = vsel %vm162, %v163, %v152
    %v165 = vshrl.u32 %v164, 1
    %v166 = vand.u32 %v164, 1
    %v167 = vsub.s32 0, %v166
    %v168 = vsel %vm162, %v167, %v166
    %vm169 = vcmp.ne.s32.totalorder %v161, 0
    %vm170 = vcmp.ne.s32.totalorder %v168, 0
    %vm171 = vcmp.lt.s32.totalorder %v161, 0
    %vm172 = vcmp.lt.s32.totalorder %v168, 0
    %vm173 = vmand %vm171, %vm169
    %vm174 = vmand %vm172, %vm170
    %v175 = vadd.s32 %v161, 2
    %v176 = vadd.s32 %v168, 2
    %v177 = vsel %vm173, %v175, %v161
    %v178 = vsel %vm174, %v176, %v168
    %vm179 = vcmp.lt.s32.totalorder %v154, 0
    %v180 = vsub.s32 0, %v154
    %v181 = vsel %vm179, %v180, %v154
    %v182 = vshrl.u32 %v181, 1
    %v183 = vand.u32 %v181, 1
    %v184 = vsub.s32 0, %v183
    %v185 = vsel %vm179, %v184, %v183
    %vm186 = vcmp.ne.s32.totalorder %v185, 0
    %vm187 = vcmp.lt.s32.totalorder %v185, 0
    %vm188 = vmand %vm187, %vm186
    %v189 = vadd.s32 %v185, 2
    %v190 = vsel %vm188, %v189, %v185
    %vm191 = vcmp.eq.s32.totalorder %v177, %v190
    %vm192 = vcmp.eq.s32.totalorder %v178, %v190
    %v193 = vsel %vm191, 0.0, -1e+30
    %v194 = vsel %vm192, 0.0, -1e+30
    %197 = vrot.lane.b32.xlu0 %v142, 96
    %v198 = vpop.permute.xlu0 %197
    %199 = vrot.lane.b32.xlu0 %v147, 96
    %v200 = vpop.permute.xlu0 %199
    %vm201 = vcmask 64512
    %v202 = vsel %vm201, %v142, 0
    %v204 = vsel %vm201, %v147, 0
    %v206 = vsel %vm201, %v198, 0
    %v208 = vsel %vm201, %v200, 0
    %210 = vmatprep.subr.mxu0 0.0
    %211 = vmatpush1.xpose.msra.mxu0 0.0
    %212 = vmatprep.subr.mxu0 0.0
    %213 = vmatpush1.xpose.msra.mxu0 0.0
    %214 = vmatprep.subr.mxu0 0.0
    %215 = vmatpush1.xpose.msra.mxu0 0.0
    %216 = vmatprep.subr.mxu0 0.0
    %217 = vmatpush1.xpose.msra.mxu0 0.0
    %218 = vmatprep.subr.mxu0 0.0
    %219 = vmatpush1.xpose.msra.mxu0 0.0
    %220 = vmatprep.subr.mxu0 0.0
    %221 = vmatpush1.xpose.msra.mxu0 0.0
    %222 = vmatprep.subr.mxu0 0.0
    %223 = vmatpush1.xpose.msra.mxu0 0.0
    %224 = vmatprep.subr.mxu0 0.0
    %225 = vmatpush1.xpose.msra.mxu0 0.0
    %226 = vmatprep.subr.mxu0 0.0
    %227 = vmatpush1.xpose.msra.mxu0 0.0
    %228 = vmatprep.subr.mxu0 0.0
    %229 = vmatpush1.xpose.msra.mxu0 0.0
    %230 = vmatprep.subr.mxu0 0.0
    %231 = vmatpush1.xpose.msra.mxu0 0.0
    %232 = vmatprep.subr.mxu0 0.0
    %233 = vmatpush1.xpose.msra.mxu0 0.0
    %234 = vmatprep.subr.mxu0 0.0
    %235 = vmatpush1.xpose.msra.mxu0 0.0
    %236 = vmatprep.subr.mxu0 0.0
    %237 = vmatpush1.xpose.msra.mxu0 0.0
    %238 = vmatprep.subr.mxu0 0.0
    %239 = vmatpush1.xpose.msra.mxu0 %v208
    %240 = vmatprep.subr.mxu0 0.0
    %241 = vmatpush1.xpose.msra.mxu0 %v206
    %242 = vmatprep.subr.mxu0 0.0
    %243 = vmatpush2.xpose.msra.mxu0 0.0
    %244 = vmatprep.subr.mxu0 0.0
    %245 = vmatpush2.xpose.msra.mxu0 0.0
    %246 = vmatprep.subr.mxu0 0.0
    %247 = vmatpush2.xpose.msra.mxu0 0.0
    %248 = vmatprep.subr.mxu0 0.0
    %249 = vmatpush2.xpose.msra.mxu0 0.0
    %250 = vmatprep.subr.mxu0 0.0
    %251 = vmatpush2.xpose.msra.mxu0 0.0
    %252 = vmatprep.subr.mxu0 0.0
    %253 = vmatpush2.xpose.msra.mxu0 0.0
    %254 = vmatprep.subr.mxu0 0.0
    %255 = vmatpush2.xpose.msra.mxu0 0.0
    %256 = vmatprep.subr.mxu0 0.0
    %257 = vmatpush2.xpose.msra.mxu0 0.0
    %258 = vmatprep.subr.mxu0 0.0
    %259 = vmatpush2.xpose.msra.mxu0 0.0
    %260 = vmatprep.subr.mxu0 0.0
    %261 = vmatpush2.xpose.msra.mxu0 0.0
    %262 = vmatprep.subr.mxu0 0.0
    %263 = vmatpush2.xpose.msra.mxu0 0.0
    %264 = vmatprep.subr.mxu0 0.0
    %265 = vmatpush2.xpose.msra.mxu0 0.0
    %266 = vmatprep.subr.mxu0 0.0
    %267 = vmatpush2.xpose.msra.mxu0 0.0
    %268 = vmatprep.subr.mxu0 0.0
    %269 = vmatpush2.xpose.msra.mxu0 0.0
    %270 = vmatprep.subr.mxu0 0.0
    %271 = vmatpush2.xpose.msra.mxu0 0.0
    %272 = vmatprep.subr.mxu0 0.0
    %273 = vmatpush2.xpose.msra.mxu0 0.0
    %274 = vmatprep.mubr.f32.mxu0 0.0
    %275 = vmatmul.mubr.f32.gmra.mxu0 %v202
    %v276 = vpop.f32.mrf.mxu0
    %v277 = vadd.f32 0.0, %v276
    %v278 = vpop.f32.mrf.mxu0
    %279 = vmatprep.mubr.f32.mxu0 0.0
    %280 = vmatmul.mubr.f32.gmra.mxu0 %v204
    %v281 = vpop.f32.mrf.mxu0
    %v282 = vadd.f32 0.0, %v281
    %v283 = vpop.f32.mrf.mxu0
    %284 = vdwg.mxu0
    %v285 = vmul.f32 %v277, 0.35355338
    %v286 = vmul.f32 %v282, 0.35355338
    %v287 = vadd.f32 %v285, %v193
    %v288 = vadd.f32 %v286, %v194
    %vm289 = vcmask 130048
    %v290 = vsel %vm289, %v287, -inf
    %291 = vmax.xlane.f32.xlu0 %v290
    %v292 = vpop.xlane.xlu0 %291
    %v293 = vsel %vm289, %v288, -inf
    %294 = vmax.xlane.f32.xlu0 %v293
    %v295 = vpop.xlane.xlu0 %294
    %v296 = vsub.f32 %v287, %v292
    %v297 = vsub.f32 %v288, %v295
    %v298 = vmul.f32 %v296, 1.442695
    %v299 = vpow.pop %v298
    %v300 = vmul.f32 %v297, 1.442695
    %v301 = vpow.pop %v300
    %v302 = vsel %vm289, %v299, 0.0
    %303 = vadd.xlane.f32.xlu0 %v302
    %v304 = vpop.xlane.xlu0 %303
    %v305 = vsel %vm289, %v301, 0.0
    %306 = vadd.xlane.f32.xlu0 %v305
    %v307 = vpop.xlane.xlu0 %306
    %v308 = vrcp.pop %v304
    %v309 = vrcp.pop %v307
    %v310 = vmul.f32 %v299, %v308
    %v311 = vmul.f32 %v301, %v309
    %312 = vrot.lane.b32.xlu0 %v142, 64
    %v313 = vpop.permute.xlu0 %312
    %314 = vrot.lane.b32.xlu0 %v147, 64
    %v315 = vpop.permute.xlu0 %314
    %v319 = vsel %vm289, %v310, 0
    %v322 = vsel %vm289, %v311, 0
    %324 = vmatprep.subr.mxu0 0.0
    %325 = vmatpush1.msra.mxu0 0.0
    %326 = vmatprep.subr.mxu0 0.0
    %327 = vmatpush1.msra.mxu0 0.0
    %328 = vmatprep.subr.mxu0 0.0
    %329 = vmatpush1.msra.mxu0 0.0
    %330 = vmatprep.subr.mxu0 0.0
    %331 = vmatpush1.msra.mxu0 0.0
    %332 = vmatprep.subr.mxu0 0.0
    %333 = vmatpush1.msra.mxu0 0.0
    %334 = vmatprep.subr.mxu0 0.0
    %335 = vmatpush1.msra.mxu0 0.0
    %336 = vmatprep.subr.mxu0 0.0
    %337 = vmatpush1.msra.mxu0 0.0
    %338 = vmatprep.subr.mxu0 0.0
    %339 = vmatpush1.msra.mxu0 0.0
    %340 = vmatprep.subr.mxu0 0.0
    %341 = vmatpush1.msra.mxu0 0.0
    %342 = vmatprep.subr.mxu0 0.0
    %343 = vmatpush1.msra.mxu0 0.0
    %344 = vmatprep.subr.mxu0 0.0
    %345 = vmatpush1.msra.mxu0 0.0
    %346 = vmatprep.subr.mxu0 0.0
    %347 = vmatpush1.msra.mxu0 0.0
    %348 = vmatprep.subr.mxu0 0.0
    %349 = vmatpush1.msra.mxu0 0.0
    %350 = vmatprep.subr.mxu0 0.0
    %351 = vmatpush1.msra.mxu0 0.0
    %352 = vmatprep.subr.mxu0 0.0
    %353 = vmatpush1.msra.mxu0 %v315
    %354 = vmatprep.subr.mxu0 0.0
    %355 = vmatpush1.msra.mxu0 %v313
    %356 = vmatprep.subr.mxu0 0.0
    %357 = vmatpush2.msra.mxu0 0.0
    %358 = vmatprep.subr.mxu0 0.0
    %359 = vmatpush2.msra.mxu0 0.0
    %360 = vmatprep.subr.mxu0 0.0
    %361 = vmatpush2.msra.mxu0 0.0
    %362 = vmatprep.subr.mxu0 0.0
    %363 = vmatpush2.msra.mxu0 0.0
    %364 = vmatprep.subr.mxu0 0.0
    %365 = vmatpush2.msra.mxu0 0.0
    %366 = vmatprep.subr.mxu0 0.0
    %367 = vmatpush2.msra.mxu0 0.0
    %368 = vmatprep.subr.mxu0 0.0
    %369 = vmatpush2.msra.mxu0 0.0
    %370 = vmatprep.subr.mxu0 0.0
    %371 = vmatpush2.msra.mxu0 0.0
    %372 = vmatprep.subr.mxu0 0.0
    %373 = vmatpush2.msra.mxu0 0.0
    %374 = vmatprep.subr.mxu0 0.0
    %375 = vmatpush2.msra.mxu0 0.0
    %376 = vmatprep.subr.mxu0 0.0
    %377 = vmatpush2.msra.mxu0 0.0
    %378 = vmatprep.subr.mxu0 0.0
    %379 = vmatpush2.msra.mxu0 0.0
    %380 = vmatprep.subr.mxu0 0.0
    %381 = vmatpush2.msra.mxu0 0.0
    %382 = vmatprep.subr.mxu0 0.0
    %383 = vmatpush2.msra.mxu0 0.0
    %384 = vmatprep.subr.mxu0 0.0
    %385 = vmatpush2.msra.mxu0 0.0
    %386 = vmatprep.subr.mxu0 0.0
    %387 = vmatpush2.msra.mxu0 0.0
    %388 = vmatprep.mubr.f32.mxu0 0.0
    %389 = vmatmul.mubr.f32.gmra.mxu0 %v319
    %v390 = vpop.f32.mrf.mxu0
    %v391 = vadd.f32 0.0, %v390
    %v392 = vpop.f32.mrf.mxu0
    %393 = vmatprep.mubr.f32.mxu0 0.0
    %394 = vmatmul.mubr.f32.gmra.mxu0 %v322
    %v395 = vpop.f32.mrf.mxu0
    %v396 = vadd.f32 0.0, %v395
    %v397 = vpop.f32.mrf.mxu0
    %398 = vdwg.mxu0
    %399 = vrot.lane.b32.xlu0 %v142, 120
    %v400 = vpop.permute.xlu0 %399
    %401 = vrot.lane.b32.xlu0 %v147, 120
    %v402 = vpop.permute.xlu0 %401
    %403 = vrot.lane.b32.xlu0 %v142, 88
    %v404 = vpop.permute.xlu0 %403
    %405 = vrot.lane.b32.xlu0 %v147, 88
    %v406 = vpop.permute.xlu0 %405
    %v407 = vsel %vm201, %v400, 0
    %v409 = vsel %vm201, %v402, 0
    %v411 = vsel %vm201, %v404, 0
    %v413 = vsel %vm201, %v406, 0
    %415 = vmatprep.subr.mxu0 0.0
    %416 = vmatpush1.xpose.msra.mxu0 0.0
    %417 = vmatprep.subr.mxu0 0.0
    %418 = vmatpush1.xpose.msra.mxu0 0.0
    %419 = vmatprep.subr.mxu0 0.0
    %420 = vmatpush1.xpose.msra.mxu0 0.0
    %421 = vmatprep.subr.mxu0 0.0
    %422 = vmatpush1.xpose.msra.mxu0 0.0
    %423 = vmatprep.subr.mxu0 0.0
    %424 = vmatpush1.xpose.msra.mxu0 0.0
    %425 = vmatprep.subr.mxu0 0.0
    %426 = vmatpush1.xpose.msra.mxu0 0.0
    %427 = vmatprep.subr.mxu0 0.0
    %428 = vmatpush1.xpose.msra.mxu0 0.0
    %429 = vmatprep.subr.mxu0 0.0
    %430 = vmatpush1.xpose.msra.mxu0 0.0
    %431 = vmatprep.subr.mxu0 0.0
    %432 = vmatpush1.xpose.msra.mxu0 0.0
    %433 = vmatprep.subr.mxu0 0.0
    %434 = vmatpush1.xpose.msra.mxu0 0.0
    %435 = vmatprep.subr.mxu0 0.0
    %436 = vmatpush1.xpose.msra.mxu0 0.0
    %437 = vmatprep.subr.mxu0 0.0
    %438 = vmatpush1.xpose.msra.mxu0 0.0
    %439 = vmatprep.subr.mxu0 0.0
    %440 = vmatpush1.xpose.msra.mxu0 0.0
    %441 = vmatprep.subr.mxu0 0.0
    %442 = vmatpush1.xpose.msra.mxu0 0.0
    %443 = vmatprep.subr.mxu0 0.0
    %444 = vmatpush1.xpose.msra.mxu0 %v413
    %445 = vmatprep.subr.mxu0 0.0
    %446 = vmatpush1.xpose.msra.mxu0 %v411
    %447 = vmatprep.subr.mxu0 0.0
    %448 = vmatpush2.xpose.msra.mxu0 0.0
    %449 = vmatprep.subr.mxu0 0.0
    %450 = vmatpush2.xpose.msra.mxu0 0.0
    %451 = vmatprep.subr.mxu0 0.0
    %452 = vmatpush2.xpose.msra.mxu0 0.0
    %453 = vmatprep.subr.mxu0 0.0
    %454 = vmatpush2.xpose.msra.mxu0 0.0
    %455 = vmatprep.subr.mxu0 0.0
    %456 = vmatpush2.xpose.msra.mxu0 0.0
    %457 = vmatprep.subr.mxu0 0.0
    %458 = vmatpush2.xpose.msra.mxu0 0.0
    %459 = vmatprep.subr.mxu0 0.0
    %460 = vmatpush2.xpose.msra.mxu0 0.0
    %461 = vmatprep.subr.mxu0 0.0
    %462 = vmatpush2.xpose.msra.mxu0 0.0
    %463 = vmatprep.subr.mxu0 0.0
    %464 = vmatpush2.xpose.msra.mxu0 0.0
    %465 = vmatprep.subr.mxu0 0.0
    %466 = vmatpush2.xpose.msra.mxu0 0.0
    %467 = vmatprep.subr.mxu0 0.0
    %468 = vmatpush2.xpose.msra.mxu0 0.0
    %469 = vmatprep.subr.mxu0 0.0
    %470 = vmatpush2.xpose.msra.mxu0 0.0
    %471 = vmatprep.subr.mxu0 0.0
    %472 = vmatpush2.xpose.msra.mxu0 0.0
    %473 = vmatprep.subr.mxu0 0.0
    %474 = vmatpush2.xpose.msra.mxu0 0.0
    %475 = vmatprep.subr.mxu0 0.0
    %476 = vmatpush2.xpose.msra.mxu0 0.0
    %477 = vmatprep.subr.mxu0 0.0
    %478 = vmatpush2.xpose.msra.mxu0 0.0
    %479 = vmatprep.mubr.f32.mxu0 0.0
    %480 = vmatmul.mubr.f32.gmra.mxu0 %v407
    %v481 = vpop.f32.mrf.mxu0
    %v482 = vadd.f32 0.0, %v481
    %v483 = vpop.f32.mrf.mxu0
    %484 = vmatprep.mubr.f32.mxu0 0.0
    %485 = vmatmul.mubr.f32.gmra.mxu0 %v409
    %v486 = vpop.f32.mrf.mxu0
    %v487 = vadd.f32 0.0, %v486
    %v488 = vpop.f32.mrf.mxu0
    %489 = vdwg.mxu0
    %v490 = vmul.f32 %v482, 0.35355338
    %v491 = vmul.f32 %v487, 0.35355338
    %v492 = vadd.f32 %v490, %v193
    %v493 = vadd.f32 %v491, %v194
    %v494 = vsel %vm289, %v492, -inf
    %495 = vmax.xlane.f32.xlu0 %v494
    %v496 = vpop.xlane.xlu0 %495
    %v497 = vsel %vm289, %v493, -inf
    %498 = vmax.xlane.f32.xlu0 %v497
    %v499 = vpop.xlane.xlu0 %498
    %v500 = vsub.f32 %v492, %v496
    %v501 = vsub.f32 %v493, %v499
    %v502 = vmul.f32 %v500, 1.442695
    %v503 = vpow.pop %v502
    %v504 = vmul.f32 %v501, 1.442695
    %v505 = vpow.pop %v504
    %v506 = vsel %vm289, %v503, 0.0
    %507 = vadd.xlane.f32.xlu0 %v506
    %v508 = vpop.xlane.xlu0 %507
    %v509 = vsel %vm289, %v505, 0.0
    %510 = vadd.xlane.f32.xlu0 %v509
    %v511 = vpop.xlane.xlu0 %510
    %v512 = vrcp.pop %v508
    %v513 = vrcp.pop %v511
    %v514 = vmul.f32 %v503, %v512
    %v515 = vmul.f32 %v505, %v513
    %516 = vrot.lane.b32.xlu0 %v142, 56
    %v517 = vpop.permute.xlu0 %516
    %518 = vrot.lane.b32.xlu0 %v147, 56
    %v519 = vpop.permute.xlu0 %518
    %v523 = vsel %vm289, %v514, 0
    %v526 = vsel %vm289, %v515, 0
    %528 = vmatprep.subr.mxu0 0.0
    %529 = vmatpush1.msra.mxu0 0.0
    %530 = vmatprep.subr.mxu0 0.0
    %531 = vmatpush1.msra.mxu0 0.0
    %532 = vmatprep.subr.mxu0 0.0
    %533 = vmatpush1.msra.mxu0 0.0
    %534 = vmatprep.subr.mxu0 0.0
    %535 = vmatpush1.msra.mxu0 0.0
    %536 = vmatprep.subr.mxu0 0.0
    %537 = vmatpush1.msra.mxu0 0.0
    %538 = vmatprep.subr.mxu0 0.0
    %539 = vmatpush1.msra.mxu0 0.0
    %540 = vmatprep.subr.mxu0 0.0
    %541 = vmatpush1.msra.mxu0 0.0
    %542 = vmatprep.subr.mxu0 0.0
    %543 = vmatpush1.msra.mxu0 0.0
    %544 = vmatprep.subr.mxu0 0.0
    %545 = vmatpush1.msra.mxu0 0.0
    %546 = vmatprep.subr.mxu0 0.0
    %547 = vmatpush1.msra.mxu0 0.0
    %548 = vmatprep.subr.mxu0 0.0
    %549 = vmatpush1.msra.mxu0 0.0
    %550 = vmatprep.subr.mxu0 0.0
    %551 = vmatpush1.msra.mxu0 0.0
    %552 = vmatprep.subr.mxu0 0.0
    %553 = vmatpush1.msra.mxu0 0.0
    %554 = vmatprep.subr.mxu0 0.0
    %555 = vmatpush1.msra.mxu0 0.0
    %556 = vmatprep.subr.mxu0 0.0
    %557 = vmatpush1.msra.mxu0 %v519
    %558 = vmatprep.subr.mxu0 0.0
    %559 = vmatpush1.msra.mxu0 %v517
    %560 = vmatprep.subr.mxu0 0.0
    %561 = vmatpush2.msra.mxu0 0.0
    %562 = vmatprep.subr.mxu0 0.0
    %563 = vmatpush2.msra.mxu0 0.0
    %564 = vmatprep.subr.mxu0 0.0
    %565 = vmatpush2.msra.mxu0 0.0
    %566 = vmatprep.subr.mxu0 0.0
    %567 = vmatpush2.msra.mxu0 0.0
    %568 = vmatprep.subr.mxu0 0.0
    %569 = vmatpush2.msra.mxu0 0.0
    %570 = vmatprep.subr.mxu0 0.0
    %571 = vmatpush2.msra.mxu0 0.0
    %572 = vmatprep.subr.mxu0 0.0
    %573 = vmatpush2.msra.mxu0 0.0
    %574 = vmatprep.subr.mxu0 0.0
    %575 = vmatpush2.msra.mxu0 0.0
    %576 = vmatprep.subr.mxu0 0.0
    %577 = vmatpush2.msra.mxu0 0.0
    %578 = vmatprep.subr.mxu0 0.0
    %579 = vmatpush2.msra.mxu0 0.0
    %580 = vmatprep.subr.mxu0 0.0
    %581 = vmatpush2.msra.mxu0 0.0
    %582 = vmatprep.subr.mxu0 0.0
    %583 = vmatpush2.msra.mxu0 0.0
    %584 = vmatprep.subr.mxu0 0.0
    %585 = vmatpush2.msra.mxu0 0.0
    %586 = vmatprep.subr.mxu0 0.0
    %587 = vmatpush2.msra.mxu0 0.0
    %588 = vmatprep.subr.mxu0 0.0
    %589 = vmatpush2.msra.mxu0 0.0
    %590 = vmatprep.subr.mxu0 0.0
    %591 = vmatpush2.msra.mxu0 0.0
    %592 = vmatprep.mubr.f32.mxu0 0.0
    %593 = vmatmul.mubr.f32.gmra.mxu0 %v523
    %v594 = vpop.f32.mrf.mxu0
    %v595 = vadd.f32 0.0, %v594
    %v596 = vpop.f32.mrf.mxu0
    %597 = vmatprep.mubr.f32.mxu0 0.0
    %598 = vmatmul.mubr.f32.gmra.mxu0 %v526
    %v599 = vpop.f32.mrf.mxu0
    %v600 = vadd.f32 0.0, %v599
    %v601 = vpop.f32.mrf.mxu0
    %602 = vdwg.mxu0
    %603 = vrot.lane.b32.xlu0 %v142, 112
    %v604 = vpop.permute.xlu0 %603
    %605 = vrot.lane.b32.xlu0 %v147, 112
    %v606 = vpop.permute.xlu0 %605
    %607 = vrot.lane.b32.xlu0 %v142, 80
    %v608 = vpop.permute.xlu0 %607
    %609 = vrot.lane.b32.xlu0 %v147, 80
    %v610 = vpop.permute.xlu0 %609
    %v611 = vsel %vm201, %v604, 0
    %v613 = vsel %vm201, %v606, 0
    %v615 = vsel %vm201, %v608, 0
    %v617 = vsel %vm201, %v610, 0
    %619 = vmatprep.subr.mxu0 0.0
    %620 = vmatpush1.xpose.msra.mxu0 0.0
    %621 = vmatprep.subr.mxu0 0.0
    %622 = vmatpush1.xpose.msra.mxu0 0.0
    %623 = vmatprep.subr.mxu0 0.0
    %624 = vmatpush1.xpose.msra.mxu0 0.0
    %625 = vmatprep.subr.mxu0 0.0
    %626 = vmatpush1.xpose.msra.mxu0 0.0
    %627 = vmatprep.subr.mxu0 0.0
    %628 = vmatpush1.xpose.msra.mxu0 0.0
    %629 = vmatprep.subr.mxu0 0.0
    %630 = vmatpush1.xpose.msra.mxu0 0.0
    %631 = vmatprep.subr.mxu0 0.0
    %632 = vmatpush1.xpose.msra.mxu0 0.0
    %633 = vmatprep.subr.mxu0 0.0
    %634 = vmatpush1.xpose.msra.mxu0 0.0
    %635 = vmatprep.subr.mxu0 0.0
    %636 = vmatpush1.xpose.msra.mxu0 0.0
    %637 = vmatprep.subr.mxu0 0.0
    %638 = vmatpush1.xpose.msra.mxu0 0.0
    %639 = vmatprep.subr.mxu0 0.0
    %640 = vmatpush1.xpose.msra.mxu0 0.0
    %641 = vmatprep.subr.mxu0 0.0
    %642 = vmatpush1.xpose.msra.mxu0 0.0
    %643 = vmatprep.subr.mxu0 0.0
    %644 = vmatpush1.xpose.msra.mxu0 0.0
    %645 = vmatprep.subr.mxu0 0.0
    %646 = vmatpush1.xpose.msra.mxu0 0.0
    %647 = vmatprep.subr.mxu0 0.0
    %648 = vmatpush1.xpose.msra.mxu0 %v617
    %649 = vmatprep.subr.mxu0 0.0
    %650 = vmatpush1.xpose.msra.mxu0 %v615
    %651 = vmatprep.subr.mxu0 0.0
    %652 = vmatpush2.xpose.msra.mxu0 0.0
    %653 = vmatprep.subr.mxu0 0.0
    %654 = vmatpush2.xpose.msra.mxu0 0.0
    %655 = vmatprep.subr.mxu0 0.0
    %656 = vmatpush2.xpose.msra.mxu0 0.0
    %657 = vmatprep.subr.mxu0 0.0
    %658 = vmatpush2.xpose.msra.mxu0 0.0
    %659 = vmatprep.subr.mxu0 0.0
    %660 = vmatpush2.xpose.msra.mxu0 0.0
    %661 = vmatprep.subr.mxu0 0.0
    %662 = vmatpush2.xpose.msra.mxu0 0.0
    %663 = vmatprep.subr.mxu0 0.0
    %664 = vmatpush2.xpose.msra.mxu0 0.0
    %665 = vmatprep.subr.mxu0 0.0
    %666 = vmatpush2.xpose.msra.mxu0 0.0
    %667 = vmatprep.subr.mxu0 0.0
    %668 = vmatpush2.xpose.msra.mxu0 0.0
    %669 = vmatprep.subr.mxu0 0.0
    %670 = vmatpush2.xpose.msra.mxu0 0.0
    %671 = vmatprep.subr.mxu0 0.0
    %672 = vmatpush2.xpose.msra.mxu0 0.0
    %673 = vmatprep.subr.mxu0 0.0
    %674 = vmatpush2.xpose.msra.mxu0 0.0
    %675 = vmatprep.subr.mxu0 0.0
    %676 = vmatpush2.xpose.msra.mxu0 0.0
    %677 = vmatprep.subr.mxu0 0.0
    %678 = vmatpush2.xpose.msra.mxu0 0.0
    %679 = vmatprep.subr.mxu0 0.0
    %680 = vmatpush2.xpose.msra.mxu0 0.0
    %681 = vmatprep.subr.mxu0 0.0
    %682 = vmatpush2.xpose.msra.mxu0 0.0
    %683 = vmatprep.mubr.f32.mxu0 0.0
    %684 = vmatmul.mubr.f32.gmra.mxu0 %v611
    %v685 = vpop.f32.mrf.mxu0
    %v686 = vadd.f32 0.0, %v685
    %v687 = vpop.f32.mrf.mxu0
    %688 = vmatprep.mubr.f32.mxu0 0.0
    %689 = vmatmul.mubr.f32.gmra.mxu0 %v613
    %v690 = vpop.f32.mrf.mxu0
    %v691 = vadd.f32 0.0, %v690
    %v692 = vpop.f32.mrf.mxu0
    %693 = vdwg.mxu0
    %v694 = vmul.f32 %v686, 0.35355338
    %v695 = vmul.f32 %v691, 0.35355338
    %v696 = vadd.f32 %v694, %v193
    %v697 = vadd.f32 %v695, %v194
    %v698 = vsel %vm289, %v696, -inf
    %699 = vmax.xlane.f32.xlu0 %v698
    %v700 = vpop.xlane.xlu0 %699
    %v701 = vsel %vm289, %v697, -inf
    %702 = vmax.xlane.f32.xlu0 %v701
    %v703 = vpop.xlane.xlu0 %702
    %v704 = vsub.f32 %v696, %v700
    %v705 = vsub.f32 %v697, %v703
    %v706 = vmul.f32 %v704, 1.442695
    %v707 = vpow.pop %v706
    %v708 = vmul.f32 %v705, 1.442695
    %v709 = vpow.pop %v708
    %v710 = vsel %vm289, %v707, 0.0
    %711 = vadd.xlane.f32.xlu0 %v710
    %v712 = vpop.xlane.xlu0 %711
    %v713 = vsel %vm289, %v709, 0.0
    %714 = vadd.xlane.f32.xlu0 %v713
    %v715 = vpop.xlane.xlu0 %714
    %v716 = vrcp.pop %v712
    %v717 = vrcp.pop %v715
    %v718 = vmul.f32 %v707, %v716
    %v719 = vmul.f32 %v709, %v717
    %720 = vrot.lane.b32.xlu0 %v142, 48
    %v721 = vpop.permute.xlu0 %720
    %722 = vrot.lane.b32.xlu0 %v147, 48
    %v723 = vpop.permute.xlu0 %722
    %v727 = vsel %vm289, %v718, 0
    %v730 = vsel %vm289, %v719, 0
    %732 = vmatprep.subr.mxu0 0.0
    %733 = vmatpush1.msra.mxu0 0.0
    %734 = vmatprep.subr.mxu0 0.0
    %735 = vmatpush1.msra.mxu0 0.0
    %736 = vmatprep.subr.mxu0 0.0
    %737 = vmatpush1.msra.mxu0 0.0
    %738 = vmatprep.subr.mxu0 0.0
    %739 = vmatpush1.msra.mxu0 0.0
    %740 = vmatprep.subr.mxu0 0.0
    %741 = vmatpush1.msra.mxu0 0.0
    %742 = vmatprep.subr.mxu0 0.0
    %743 = vmatpush1.msra.mxu0 0.0
    %744 = vmatprep.subr.mxu0 0.0
    %745 = vmatpush1.msra.mxu0 0.0
    %746 = vmatprep.subr.mxu0 0.0
    %747 = vmatpush1.msra.mxu0 0.0
    %748 = vmatprep.subr.mxu0 0.0
    %749 = vmatpush1.msra.mxu0 0.0
    %750 = vmatprep.subr.mxu0 0.0
    %751 = vmatpush1.msra.mxu0 0.0
    %752 = vmatprep.subr.mxu0 0.0
    %753 = vmatpush1.msra.mxu0 0.0
    %754 = vmatprep.subr.mxu0 0.0
    %755 = vmatpush1.msra.mxu0 0.0
    %756 = vmatprep.subr.mxu0 0.0
    %757 = vmatpush1.msra.mxu0 0.0
    %758 = vmatprep.subr.mxu0 0.0
    %759 = vmatpush1.msra.mxu0 0.0
    %760 = vmatprep.subr.mxu0 0.0
    %761 = vmatpush1.msra.mxu0 %v723
    %762 = vmatprep.subr.mxu0 0.0
    %763 = vmatpush1.msra.mxu0 %v721
    %764 = vmatprep.subr.mxu0 0.0
    %765 = vmatpush2.msra.mxu0 0.0
    %766 = vmatprep.subr.mxu0 0.0
    %767 = vmatpush2.msra.mxu0 0.0
    %768 = vmatprep.subr.mxu0 0.0
    %769 = vmatpush2.msra.mxu0 0.0
    %770 = vmatprep.subr.mxu0 0.0
    %771 = vmatpush2.msra.mxu0 0.0
    %772 = vmatprep.subr.mxu0 0.0
    %773 = vmatpush2.msra.mxu0 0.0
    %774 = vmatprep.subr.mxu0 0.0
    %775 = vmatpush2.msra.mxu0 0.0
    %776 = vmatprep.subr.mxu0 0.0
    %777 = vmatpush2.msra.mxu0 0.0
    %778 = vmatprep.subr.mxu0 0.0
    %779 = vmatpush2.msra.mxu0 0.0
    %780 = vmatprep.subr.mxu0 0.0
    %781 = vmatpush2.msra.mxu0 0.0
    %782 = vmatprep.subr.mxu0 0.0
    %783 = vmatpush2.msra.mxu0 0.0
    %784 = vmatprep.subr.mxu0 0.0
    %785 = vmatpush2.msra.mxu0 0.0
    %786 = vmatprep.subr.mxu0 0.0
    %787 = vmatpush2.msra.mxu0 0.0
    %788 = vmatprep.subr.mxu0 0.0
    %789 = vmatpush2.msra.mxu0 0.0
    %790 = vmatprep.subr.mxu0 0.0
    %791 = vmatpush2.msra.mxu0 0.0
    %792 = vmatprep.subr.mxu0 0.0
    %793 = vmatpush2.msra.mxu0 0.0
    %794 = vmatprep.subr.mxu0 0.0
    %795 = vmatpush2.msra.mxu0 0.0
    %796 = vmatprep.mubr.f32.mxu0 0.0
    %797 = vmatmul.mubr.f32.gmra.mxu0 %v727
    %v798 = vpop.f32.mrf.mxu0
    %v799 = vadd.f32 0.0, %v798
    %v800 = vpop.f32.mrf.mxu0
    %801 = vmatprep.mubr.f32.mxu0 0.0
    %802 = vmatmul.mubr.f32.gmra.mxu0 %v730
    %v803 = vpop.f32.mrf.mxu0
    %v804 = vadd.f32 0.0, %v803
    %v805 = vpop.f32.mrf.mxu0
    %806 = vdwg.mxu0
    %807 = vrot.lane.b32.xlu0 %v142, 104
    %v808 = vpop.permute.xlu0 %807
    %809 = vrot.lane.b32.xlu0 %v147, 104
    %v810 = vpop.permute.xlu0 %809
    %811 = vrot.lane.b32.xlu0 %v142, 72
    %v812 = vpop.permute.xlu0 %811
    %813 = vrot.lane.b32.xlu0 %v147, 72
    %v814 = vpop.permute.xlu0 %813
    %v815 = vsel %vm201, %v808, 0
    %v817 = vsel %vm201, %v810, 0
    %v819 = vsel %vm201, %v812, 0
    %v821 = vsel %vm201, %v814, 0
    %823 = vmatprep.subr.mxu0 0.0
    %824 = vmatpush1.xpose.msra.mxu0 0.0
    %825 = vmatprep.subr.mxu0 0.0
    %826 = vmatpush1.xpose.msra.mxu0 0.0
    %827 = vmatprep.subr.mxu0 0.0
    %828 = vmatpush1.xpose.msra.mxu0 0.0
    %829 = vmatprep.subr.mxu0 0.0
    %830 = vmatpush1.xpose.msra.mxu0 0.0
    %831 = vmatprep.subr.mxu0 0.0
    %832 = vmatpush1.xpose.msra.mxu0 0.0
    %833 = vmatprep.subr.mxu0 0.0
    %834 = vmatpush1.xpose.msra.mxu0 0.0
    %835 = vmatprep.subr.mxu0 0.0
    %836 = vmatpush1.xpose.msra.mxu0 0.0
    %837 = vmatprep.subr.mxu0 0.0
    %838 = vmatpush1.xpose.msra.mxu0 0.0
    %839 = vmatprep.subr.mxu0 0.0
    %840 = vmatpush1.xpose.msra.mxu0 0.0
    %841 = vmatprep.subr.mxu0 0.0
    %842 = vmatpush1.xpose.msra.mxu0 0.0
    %843 = vmatprep.subr.mxu0 0.0
    %844 = vmatpush1.xpose.msra.mxu0 0.0
    %845 = vmatprep.subr.mxu0 0.0
    %846 = vmatpush1.xpose.msra.mxu0 0.0
    %847 = vmatprep.subr.mxu0 0.0
    %848 = vmatpush1.xpose.msra.mxu0 0.0
    %849 = vmatprep.subr.mxu0 0.0
    %850 = vmatpush1.xpose.msra.mxu0 0.0
    %851 = vmatprep.subr.mxu0 0.0
    %852 = vmatpush1.xpose.msra.mxu0 %v821
    %853 = vmatprep.subr.mxu0 0.0
    %854 = vmatpush1.xpose.msra.mxu0 %v819
    %855 = vmatprep.subr.mxu0 0.0
    %856 = vmatpush2.xpose.msra.mxu0 0.0
    %857 = vmatprep.subr.mxu0 0.0
    %858 = vmatpush2.xpose.msra.mxu0 0.0
    %859 = vmatprep.subr.mxu0 0.0
    %860 = vmatpush2.xpose.msra.mxu0 0.0
    %861 = vmatprep.subr.mxu0 0.0
    %862 = vmatpush2.xpose.msra.mxu0 0.0
    %863 = vmatprep.subr.mxu0 0.0
    %864 = vmatpush2.xpose.msra.mxu0 0.0
    %865 = vmatprep.subr.mxu0 0.0
    %866 = vmatpush2.xpose.msra.mxu0 0.0
    %867 = vmatprep.subr.mxu0 0.0
    %868 = vmatpush2.xpose.msra.mxu0 0.0
    %869 = vmatprep.subr.mxu0 0.0
    %870 = vmatpush2.xpose.msra.mxu0 0.0
    %871 = vmatprep.subr.mxu0 0.0
    %872 = vmatpush2.xpose.msra.mxu0 0.0
    %873 = vmatprep.subr.mxu0 0.0
    %874 = vmatpush2.xpose.msra.mxu0 0.0
    %875 = vmatprep.subr.mxu0 0.0
    %876 = vmatpush2.xpose.msra.mxu0 0.0
    %877 = vmatprep.subr.mxu0 0.0
    %878 = vmatpush2.xpose.msra.mxu0 0.0
    %879 = vmatprep.subr.mxu0 0.0
    %880 = vmatpush2.xpose.msra.mxu0 0.0
    %881 = vmatprep.subr.mxu0 0.0
    %882 = vmatpush2.xpose.msra.mxu0 0.0
    %883 = vmatprep.subr.mxu0 0.0
    %884 = vmatpush2.xpose.msra.mxu0 0.0
    %885 = vmatprep.subr.mxu0 0.0
    %886 = vmatpush2.xpose.msra.mxu0 0.0
    %887 = vmatprep.mubr.f32.mxu0 0.0
    %888 = vmatmul.mubr.f32.gmra.mxu0 %v815
    %v889 = vpop.f32.mrf.mxu0
    %v890 = vadd.f32 0.0, %v889
    %v891 = vpop.f32.mrf.mxu0
    %892 = vmatprep.mubr.f32.mxu0 0.0
    %893 = vmatmul.mubr.f32.gmra.mxu0 %v817
    %v894 = vpop.f32.mrf.mxu0
    %v895 = vadd.f32 0.0, %v894
    %v896 = vpop.f32.mrf.mxu0
    %897 = vdwg.mxu0
    %v898 = vmul.f32 %v890, 0.35355338
    %v899 = vmul.f32 %v895, 0.35355338
    %v900 = vadd.f32 %v898, %v193
    %v901 = vadd.f32 %v899, %v194
    %v902 = vsel %vm289, %v900, -inf
    %903 = vmax.xlane.f32.xlu0 %v902
    %v904 = vpop.xlane.xlu0 %903
    %v905 = vsel %vm289, %v901, -inf
    %906 = vmax.xlane.f32.xlu0 %v905
    %v907 = vpop.xlane.xlu0 %906
    %v908 = vsub.f32 %v900, %v904
    %v909 = vsub.f32 %v901, %v907
    %v910 = vmul.f32 %v908, 1.442695
    %v911 = vpow.pop %v910
    %v912 = vmul.f32 %v909, 1.442695
    %v913 = vpow.pop %v912
    %v914 = vsel %vm289, %v911, 0.0
    %915 = vadd.xlane.f32.xlu0 %v914
    %v916 = vpop.xlane.xlu0 %915
    %v917 = vsel %vm289, %v913, 0.0
    %918 = vadd.xlane.f32.xlu0 %v917
    %v919 = vpop.xlane.xlu0 %918
    %v920 = vrcp.pop %v916
    %v921 = vrcp.pop %v919
    %v922 = vmul.f32 %v911, %v920
    %v923 = vmul.f32 %v913, %v921
    %924 = vrot.lane.b32.xlu0 %v142, 40
    %v925 = vpop.permute.xlu0 %924
    %926 = vrot.lane.b32.xlu0 %v147, 40
    %v927 = vpop.permute.xlu0 %926
    %v931 = vsel %vm289, %v922, 0
    %v934 = vsel %vm289, %v923, 0
    %936 = vmatprep.subr.mxu0 0.0
    %937 = vmatpush1.msra.mxu0 0.0
    %938 = vmatprep.subr.mxu0 0.0
    %939 = vmatpush1.msra.mxu0 0.0
    %940 = vmatprep.subr.mxu0 0.0
    %941 = vmatpush1.msra.mxu0 0.0
    %942 = vmatprep.subr.mxu0 0.0
    %943 = vmatpush1.msra.mxu0 0.0
    %944 = vmatprep.subr.mxu0 0.0
    %945 = vmatpush1.msra.mxu0 0.0
    %946 = vmatprep.subr.mxu0 0.0
    %947 = vmatpush1.msra.mxu0 0.0
    %948 = vmatprep.subr.mxu0 0.0
    %949 = vmatpush1.msra.mxu0 0.0
    %950 = vmatprep.subr.mxu0 0.0
    %951 = vmatpush1.msra.mxu0 0.0
    %952 = vmatprep.subr.mxu0 0.0
    %953 = vmatpush1.msra.mxu0 0.0
    %954 = vmatprep.subr.mxu0 0.0
    %955 = vmatpush1.msra.mxu0 0.0
    %956 = vmatprep.subr.mxu0 0.0
    %957 = vmatpush1.msra.mxu0 0.0
    %958 = vmatprep.subr.mxu0 0.0
    %959 = vmatpush1.msra.mxu0 0.0
    %960 = vmatprep.subr.mxu0 0.0
    %961 = vmatpush1.msra.mxu0 0.0
    %962 = vmatprep.subr.mxu0 0.0
    %963 = vmatpush1.msra.mxu0 0.0
    %964 = vmatprep.subr.mxu0 0.0
    %965 = vmatpush1.msra.mxu0 %v927
    %966 = vmatprep.subr.mxu0 0.0
    %967 = vmatpush1.msra.mxu0 %v925
    %968 = vmatprep.subr.mxu0 0.0
    %969 = vmatpush2.msra.mxu0 0.0
    %970 = vmatprep.subr.mxu0 0.0
    %971 = vmatpush2.msra.mxu0 0.0
    %972 = vmatprep.subr.mxu0 0.0
    %973 = vmatpush2.msra.mxu0 0.0
    %974 = vmatprep.subr.mxu0 0.0
    %975 = vmatpush2.msra.mxu0 0.0
    %976 = vmatprep.subr.mxu0 0.0
    %977 = vmatpush2.msra.mxu0 0.0
    %978 = vmatprep.subr.mxu0 0.0
    %979 = vmatpush2.msra.mxu0 0.0
    %980 = vmatprep.subr.mxu0 0.0
    %981 = vmatpush2.msra.mxu0 0.0
    %982 = vmatprep.subr.mxu0 0.0
    %983 = vmatpush2.msra.mxu0 0.0
    %984 = vmatprep.subr.mxu0 0.0
    %985 = vmatpush2.msra.mxu0 0.0
    %986 = vmatprep.subr.mxu0 0.0
    %987 = vmatpush2.msra.mxu0 0.0
    %988 = vmatprep.subr.mxu0 0.0
    %989 = vmatpush2.msra.mxu0 0.0
    %990 = vmatprep.subr.mxu0 0.0
    %991 = vmatpush2.msra.mxu0 0.0
    %992 = vmatprep.subr.mxu0 0.0
    %993 = vmatpush2.msra.mxu0 0.0
    %994 = vmatprep.subr.mxu0 0.0
    %995 = vmatpush2.msra.mxu0 0.0
    %996 = vmatprep.subr.mxu0 0.0
    %997 = vmatpush2.msra.mxu0 0.0
    %998 = vmatprep.subr.mxu0 0.0
    %999 = vmatpush2.msra.mxu0 0.0
    %1000 = vmatprep.mubr.f32.mxu0 0.0
    %1001 = vmatmul.mubr.f32.gmra.mxu0 %v931
    %v1002 = vpop.f32.mrf.mxu0
    %v1003 = vadd.f32 0.0, %v1002
    %v1004 = vpop.f32.mrf.mxu0
    %1005 = vmatprep.mubr.f32.mxu0 0.0
    %1006 = vmatmul.mubr.f32.gmra.mxu0 %v934
    %v1007 = vpop.f32.mrf.mxu0
    %v1008 = vadd.f32 0.0, %v1007
    %v1009 = vpop.f32.mrf.mxu0
    %1010 = vdwg.mxu0
    %1013 = vrot.lane.b32.xlu0 %v595, 8
    %v1014 = vpop.permute.xlu0 %1013
    %1015 = vrot.lane.b32.xlu0 %v600, 8
    %v1016 = vpop.permute.xlu0 %1015
    %1021 = vrot.lane.b32.xlu0 %v799, 16
    %v1022 = vpop.permute.xlu0 %1021
    %1023 = vrot.lane.b32.xlu0 %v804, 16
    %v1024 = vpop.permute.xlu0 %1023
    %1029 = vrot.lane.b32.xlu0 %v1003, 24
    %v1030 = vpop.permute.xlu0 %1029
    %1031 = vrot.lane.b32.xlu0 %v1008, 24
    %v1032 = vpop.permute.xlu0 %1031
    %v1035 = vsel %vm201, %v391, %v1014
    %v1036 = vsel %vm201, %v396, %v1016
    %v1037 = vsel %vm289, %v1035, %v1022
    %v1038 = vsel %vm289, %v1036, %v1024
    %vm1039 = vcmask 195584
    %v1040 = vsel %vm1039, %v1037, %v1030
    %v1041 = vsel %vm1039, %v1038, %v1032
    %v1042 = vlaneseq
    %v1043 = vshrl.u32 %v1042, 7
    %v1044 = vsub.s32 0, %v1043
    %v1045 = vrot.slane %v35, %v1044
    %v1047 = vsel %vm68, %v1040, 0
    %v1050 = vsel %vm68, %v1041, 0
    %1052 = vmatprep.subr.mxu0 0.0
    %1053 = vmatpush1.msra.mxu0 0.0
    %1054 = vmatprep.subr.mxu0 0.0
    %1055 = vmatpush1.msra.mxu0 0.0
    %1056 = vmatprep.subr.mxu0 0.0
    %1057 = vmatpush1.msra.mxu0 0.0
    %1058 = vmatprep.subr.mxu0 0.0
    %1059 = vmatpush1.msra.mxu0 0.0
    %1060 = vmatprep.subr.mxu0 0.0
    %1061 = vmatpush1.msra.mxu0 0.0
    %1062 = vmatprep.subr.mxu0 0.0
    %1063 = vmatpush1.msra.mxu0 0.0
    %1064 = vmatprep.subr.mxu0 0.0
    %1065 = vmatpush1.msra.mxu0 0.0
    %1066 = vmatprep.subr.mxu0 0.0
    %1067 = vmatpush1.msra.mxu0 0.0
    %1068 = vmatprep.subr.mxu0 0.0
    %1069 = vmatpush1.msra.mxu0 0.0
    %1070 = vmatprep.subr.mxu0 0.0
    %1071 = vmatpush1.msra.mxu0 0.0
    %1072 = vmatprep.subr.mxu0 0.0
    %1073 = vmatpush1.msra.mxu0 0.0
    %1074 = vmatprep.subr.mxu0 0.0
    %1075 = vmatpush1.msra.mxu0 0.0
    %1076 = vmatprep.subr.mxu0 0.0
    %1077 = vmatpush1.msra.mxu0 %v34
    %1078 = vmatprep.subr.mxu0 0.0
    %1079 = vmatpush1.msra.mxu0 %v33
    %1080 = vmatprep.subr.mxu0 0.0
    %1081 = vmatpush1.msra.mxu0 %v32
    %1082 = vmatprep.subr.mxu0 0.0
    %1083 = vmatpush1.msra.mxu0 %v31
    %1084 = vmatprep.subr.mxu0 0.0
    %1085 = vmatpush2.msra.mxu0 0.0
    %1086 = vmatprep.subr.mxu0 0.0
    %1087 = vmatpush2.msra.mxu0 0.0
    %1088 = vmatprep.subr.mxu0 0.0
    %1089 = vmatpush2.msra.mxu0 0.0
    %1090 = vmatprep.subr.mxu0 0.0
    %1091 = vmatpush2.msra.mxu0 0.0
    %1092 = vmatprep.subr.mxu0 0.0
    %1093 = vmatpush2.msra.mxu0 0.0
    %1094 = vmatprep.subr.mxu0 0.0
    %1095 = vmatpush2.msra.mxu0 0.0
    %1096 = vmatprep.subr.mxu0 0.0
    %1097 = vmatpush2.msra.mxu0 0.0
    %1098 = vmatprep.subr.mxu0 0.0
    %1099 = vmatpush2.msra.mxu0 0.0
    %1100 = vmatprep.subr.mxu0 0.0
    %1101 = vmatpush2.msra.mxu0 0.0
    %1102 = vmatprep.subr.mxu0 0.0
    %1103 = vmatpush2.msra.mxu0 0.0
    %1104 = vmatprep.subr.mxu0 0.0
    %1105 = vmatpush2.msra.mxu0 0.0
    %1106 = vmatprep.subr.mxu0 0.0
    %1107 = vmatpush2.msra.mxu0 0.0
    %1108 = vmatprep.subr.mxu0 0.0
    %1109 = vmatpush2.msra.mxu0 0.0
    %1110 = vmatprep.subr.mxu0 0.0
    %1111 = vmatpush2.msra.mxu0 0.0
    %1112 = vmatprep.subr.mxu0 0.0
    %1113 = vmatpush2.msra.mxu0 0.0
    %1114 = vmatprep.subr.mxu0 0.0
    %1115 = vmatpush2.msra.mxu0 0.0
    %1116 = vmatprep.mubr.f32.mxu0 0.0
    %1117 = vmatmul.mubr.f32.gmra.mxu0 %v1047
    %v1118 = vpop.f32.mrf.mxu0
    %v1119 = vadd.f32 %v1045, %v1118
    %v1120 = vpop.f32.mrf.mxu0
    %1121 = vmatprep.mubr.f32.mxu0 0.0
    %1122 = vmatmul.mubr.f32.gmra.mxu0 %v1050
    %v1123 = vpop.f32.mrf.mxu0
    %v1124 = vadd.f32 %v1045, %v1123
    %v1125 = vpop.f32.mrf.mxu0
    %1126 = vdwg.mxu0
    %v1127 = vadd.f32 %v24, %v1119
    %v1128 = vadd.f32 %v25, %v1124
    %v1129 = vsel %vm68, %v1127, 0.0
    %1130 = vadd.xlane.f32.xlu0 %v1129
    %v1131 = vpop.xlane.xlu0 %1130
    %v1132 = vsel %vm68, %v1128, 0.0
    %1133 = vadd.xlane.f32.xlu0 %v1132
    %v1134 = vpop.xlane.xlu0 %1133
    %v1135 = vrcp.pop 32.0
    %v1136 = vmul.f32 %v1131, %v1135
    %v1137 = vmul.f32 %v1134, %v1135
    %v1138 = vsub.f32 %v1127, %v1136
    %v1139 = vsub.f32 %v1128, %v1137
    %v1140 = vmul.f32 %v1138, %v1138
    %v1141 = vmul.f32 %v1139, %v1139
    %v1142 = vsel %vm68, %v1140, 0.0
    %1143 = vadd.xlane.f32.xlu0 %v1142
    %v1144 = vpop.xlane.xlu0 %1143
    %v1145 = vsel %vm68, %v1141, 0.0
    %1146 = vadd.xlane.f32.xlu0 %v1145
    %v1147 = vpop.xlane.xlu0 %1146
    %v1148 = vmul.f32 %v1144, %v1135
    %v1149 = vmul.f32 %v1147, %v1135
    %v1150 = vadd.f32 %v1148, 1e-05
    %v1151 = vadd.f32 %v1149, 1e-05
    %v1152 = vrsqrt.pop %v1150
    %v1153 = vrsqrt.pop %v1151
    %v1154 = vmul.f32 %v1138, %v1152
    %v1155 = vmul.f32 %v1139, %v1153
    %v1156 = vlaneseq
    %v1157 = vshrl.u32 %v1156, 7
    %v1158 = vsub.s32 0, %v1157
    %v1159 = vrot.slane %v58, %v1158
    %v1160 = vmul.f32 %v1154, %v1159
    %v1161 = vmul.f32 %v1155, %v1159
    %v1162 = vlaneseq
    %v1163 = vshrl.u32 %v1162, 7
    %v1164 = vsub.s32 0, %v1163
    %v1165 = vrot.slane %v59, %v1164
    %v1166 = vadd.f32 %v1160, %v1165
    %v1167 = vadd.f32 %v1161, %v1165
    %v1168 = vadd.f32 %v24, %v1166
    %v1169 = vadd.f32 %v25, %v1167
    %v1170 = vsel %vm68, %v1168, 0.0
    %1171 = vadd.xlane.f32.xlu0 %v1170
    %v1172 = vpop.xlane.xlu0 %1171
    %v1173 = vsel %vm68, %v1169, 0.0
    %1174 = vadd.xlane.f32.xlu0 %v1173
    %v1175 = vpop.xlane.xlu0 %1174
    %v1176 = vmul.f32 %v1172, %v1135
    %v1177 = vmul.f32 %v1175, %v1135
    %v1178 = vsub.f32 %v1168, %v1176
    %v1179 = vsub.f32 %v1169, %v1177
    %v1180 = vmul.f32 %v1178, %v1178
    %v1181 = vmul.f32 %v1179, %v1179
    %v1182 = vsel %vm68, %v1180, 0.0
    %1183 = vadd.xlane.f32.xlu0 %v1182
    %v1184 = vpop.xlane.xlu0 %1183
    %v1185 = vsel %vm68, %v1181, 0.0
    %1186 = vadd.xlane.f32.xlu0 %v1185
    %v1187 = vpop.xlane.xlu0 %1186
    %v1188 = vmul.f32 %v1184, %v1135
    %v1189 = vmul.f32 %v1187, %v1135
    %v1190 = vadd.f32 %v1188, 1e-05
    %v1191 = vadd.f32 %v1189, 1e-05
    %v1192 = vrsqrt.pop %v1190
    %v1193 = vrsqrt.pop %v1191
    %v1194 = vmul.f32 %v1178, %v1192
    %v1195 = vmul.f32 %v1179, %v1193
    %v1196 = vlaneseq
    %v1197 = vshrl.u32 %v1196, 7
    %v1198 = vsub.s32 0, %v1197
    %v1199 = vrot.slane %v60, %v1198
    %v1200 = vmul.f32 %v1194, %v1199
    %v1201 = vmul.f32 %v1195, %v1199
    %v1202 = vlaneseq
    %v1203 = vshrl.u32 %v1202, 7
    %v1204 = vsub.s32 0, %v1203
    %v1205 = vrot.slane %v61, %v1204
    %v1206 = vadd.f32 %v1200, %v1205
    %v1207 = vadd.f32 %v1201, %v1205
    %v1208 = vlaneseq
    %v1209 = vshrl.u32 %v1208, 7
    %v1210 = vsub.s32 0, %v1209
    %v1211 = vrot.slane %v40, %v1210
    %v1213 = vsel %vm68, %v1206, 0
    %v1216 = vsel %vm68, %v1207, 0
    %1218 = vmatprep.subr.mxu0 0.0
    %1219 = vmatpush1.msra.mxu0 0.0
    %1220 = vmatprep.subr.mxu0 0.0
    %1221 = vmatpush1.msra.mxu0 0.0
    %1222 = vmatprep.subr.mxu0 0.0
    %1223 = vmatpush1.msra.mxu0 0.0
    %1224 = vmatprep.subr.mxu0 0.0
    %1225 = vmatpush1.msra.mxu0 0.0
    %1226 = vmatprep.subr.mxu0 0.0
    %1227 = vmatpush1.msra.mxu0 0.0
    %1228 = vmatprep.subr.mxu0 0.0
    %1229 = vmatpush1.msra.mxu0 0.0
    %1230 = vmatprep.subr.mxu0 0.0
    %1231 = vmatpush1.msra.mxu0 0.0
    %1232 = vmatprep.subr.mxu0 0.0
    %1233 = vmatpush1.msra.mxu0 0.0
    %1234 = vmatprep.subr.mxu0 0.0
    %1235 = vmatpush1.msra.mxu0 0.0
    %1236 = vmatprep.subr.mxu0 0.0
    %1237 = vmatpush1.msra.mxu0 0.0
    %1238 = vmatprep.subr.mxu0 0.0
    %1239 = vmatpush1.msra.mxu0 0.0
    %1240 = vmatprep.subr.mxu0 0.0
    %1241 = vmatpush1.msra.mxu0 0.0
    %1242 = vmatprep.subr.mxu0 0.0
    %1243 = vmatpush1.msra.mxu0 %v39
    %1244 = vmatprep.subr.mxu0 0.0
    %1245 = vmatpush1.msra.mxu0 %v38
    %1246 = vmatprep.subr.mxu0 0.0
    %1247 = vmatpush1.msra.mxu0 %v37
    %1248 = vmatprep.subr.mxu0 0.0
    %1249 = vmatpush1.msra.mxu0 %v36
    %1250 = vmatprep.subr.mxu0 0.0
    %1251 = vmatpush2.msra.mxu0 0.0
    %1252 = vmatprep.subr.mxu0 0.0
    %1253 = vmatpush2.msra.mxu0 0.0
    %1254 = vmatprep.subr.mxu0 0.0
    %1255 = vmatpush2.msra.mxu0 0.0
    %1256 = vmatprep.subr.mxu0 0.0
    %1257 = vmatpush2.msra.mxu0 0.0
    %1258 = vmatprep.subr.mxu0 0.0
    %1259 = vmatpush2.msra.mxu0 0.0
    %1260 = vmatprep.subr.mxu0 0.0
    %1261 = vmatpush2.msra.mxu0 0.0
    %1262 = vmatprep.subr.mxu0 0.0
    %1263 = vmatpush2.msra.mxu0 0.0
    %1264 = vmatprep.subr.mxu0 0.0
    %1265 = vmatpush2.msra.mxu0 0.0
    %1266 = vmatprep.subr.mxu0 0.0
    %1267 = vmatpush2.msra.mxu0 0.0
    %1268 = vmatprep.subr.mxu0 0.0
    %1269 = vmatpush2.msra.mxu0 0.0
    %1270 = vmatprep.subr.mxu0 0.0
    %1271 = vmatpush2.msra.mxu0 0.0
    %1272 = vmatprep.subr.mxu0 0.0
    %1273 = vmatpush2.msra.mxu0 0.0
    %1274 = vmatprep.subr.mxu0 0.0
    %1275 = vmatpush2.msra.mxu0 0.0
    %1276 = vmatprep.subr.mxu0 0.0
    %1277 = vmatpush2.msra.mxu0 0.0
    %1278 = vmatprep.subr.mxu0 0.0
    %1279 = vmatpush2.msra.mxu0 0.0
    %1280 = vmatprep.subr.mxu0 0.0
    %1281 = vmatpush2.msra.mxu0 0.0
    %1282 = vmatprep.mubr.f32.mxu0 0.0
    %1283 = vmatmul.mubr.f32.gmra.mxu0 %v1213
    %v1284 = vpop.f32.mrf.mxu0
    %v1285 = vadd.f32 %v1211, %v1284
    %v1286 = vpop.f32.mrf.mxu0
    %1287 = vmatprep.mubr.f32.mxu0 0.0
    %1288 = vmatmul.mubr.f32.gmra.mxu0 %v1216
    %v1289 = vpop.f32.mrf.mxu0
    %v1290 = vadd.f32 %v1211, %v1289
    %v1291 = vpop.f32.mrf.mxu0
    %1292 = vdwg.mxu0
    %v1293 = vmax.f32 %v1285, 0.0
    %v1294 = vmax.f32 %v1290, 0.0
    %v1295 = vlaneseq
    %v1296 = vshrl.u32 %v1295, 7
    %v1297 = vsub.s32 0, %v1296
    %v1298 = vrot.slane %v57, %v1297
    %1299 = vmatprep.subr.mxu0 0.0
    %1300 = vmatpush1.msra.mxu0 %v56
    %1301 = vmatprep.subr.mxu0 0.0
    %1302 = vmatpush1.msra.mxu0 %v55
    %1303 = vmatprep.subr.mxu0 0.0
    %1304 = vmatpush1.msra.mxu0 %v54
    %1305 = vmatprep.subr.mxu0 0.0
    %1306 = vmatpush1.msra.mxu0 %v53
    %1307 = vmatprep.subr.mxu0 0.0
    %1308 = vmatpush1.msra.mxu0 %v52
    %1309 = vmatprep.subr.mxu0 0.0
    %1310 = vmatpush1.msra.mxu0 %v51
    %1311 = vmatprep.subr.mxu0 0.0
    %1312 = vmatpush1.msra.mxu0 %v50
    %1313 = vmatprep.subr.mxu0 0.0
    %1314 = vmatpush1.msra.mxu0 %v49
    %1315 = vmatprep.subr.mxu0 0.0
    %1316 = vmatpush1.msra.mxu0 %v48
    %1317 = vmatprep.subr.mxu0 0.0
    %1318 = vmatpush1.msra.mxu0 %v47
    %1319 = vmatprep.subr.mxu0 0.0
    %1320 = vmatpush1.msra.mxu0 %v46
    %1321 = vmatprep.subr.mxu0 0.0
    %1322 = vmatpush1.msra.mxu0 %v45
    %1323 = vmatprep.subr.mxu0 0.0
    %1324 = vmatpush1.msra.mxu0 %v44
    %1325 = vmatprep.subr.mxu0 0.0
    %1326 = vmatpush1.msra.mxu0 %v43
    %1327 = vmatprep.subr.mxu0 0.0
    %1328 = vmatpush1.msra.mxu0 %v42
    %1329 = vmatprep.subr.mxu0 0.0
    %1330 = vmatpush1.msra.mxu0 %v41
    %1331 = vmatprep.subr.mxu0 0.0
    %1332 = vmatpush2.msra.mxu0 0.0
    %1333 = vmatprep.subr.mxu0 0.0
    %1334 = vmatpush2.msra.mxu0 0.0
    %1335 = vmatprep.subr.mxu0 0.0
    %1336 = vmatpush2.msra.mxu0 0.0
    %1337 = vmatprep.subr.mxu0 0.0
    %1338 = vmatpush2.msra.mxu0 0.0
    %1339 = vmatprep.subr.mxu0 0.0
    %1340 = vmatpush2.msra.mxu0 0.0
    %1341 = vmatprep.subr.mxu0 0.0
    %1342 = vmatpush2.msra.mxu0 0.0
    %1343 = vmatprep.subr.mxu0 0.0
    %1344 = vmatpush2.msra.mxu0 0.0
    %1345 = vmatprep.subr.mxu0 0.0
    %1346 = vmatpush2.msra.mxu0 0.0
    %1347 = vmatprep.subr.mxu0 0.0
    %1348 = vmatpush2.msra.mxu0 0.0
    %1349 = vmatprep.subr.mxu0 0.0
    %1350 = vmatpush2.msra.mxu0 0.0
    %1351 = vmatprep.subr.mxu0 0.0
    %1352 = vmatpush2.msra.mxu0 0.0
    %1353 = vmatprep.subr.mxu0 0.0
    %1354 = vmatpush2.msra.mxu0 0.0
    %1355 = vmatprep.subr.mxu0 0.0
    %1356 = vmatpush2.msra.mxu0 0.0
    %1357 = vmatprep.subr.mxu0 0.0
    %1358 = vmatpush2.msra.mxu0 0.0
    %1359 = vmatprep.subr.mxu0 0.0
    %1360 = vmatpush2.msra.mxu0 0.0
    %1361 = vmatprep.subr.mxu0 0.0
    %1362 = vmatpush2.msra.mxu0 0.0
    %1363 = vmatprep.mubr.f32.mxu0 0.0
    %1364 = vmatmul.mubr.f32.gmra.mxu0 %v1293
    %v1365 = vpop.f32.mrf.mxu0
    %v1366 = vadd.f32 %v1298, %v1365
    %v1367 = vpop.f32.mrf.mxu0
    %1368 = vmatprep.mubr.f32.mxu0 0.0
    %1369 = vmatmul.mubr.f32.gmra.mxu0 %v1294
    %v1370 = vpop.f32.mrf.mxu0
    %v1371 = vadd.f32 %v1298, %v1370
    %v1372 = vpop.f32.mrf.mxu0
    %1373 = vdwg.mxu0
    %v1374 = vadd.f32 %v1206, %v1366
    %v1375 = vadd.f32 %v1207, %v1371
    %v1376 = vsel %vm68, %v1374, 0.0
    %1377 = vadd.xlane.f32.xlu0 %v1376
    %v1378 = vpop.xlane.xlu0 %1377
    %v1379 = vsel %vm68, %v1375, 0.0
    %1380 = vadd.xlane.f32.xlu0 %v1379
    %v1381 = vpop.xlane.xlu0 %1380
    %v1382 = vmul.f32 %v1378, %v1135
    %v1383 = vmul.f32 %v1381, %v1135
    %v1384 = vsub.f32 %v1374, %v1382
    %v1385 = vsub.f32 %v1375, %v1383
    %v1386 = vmul.f32 %v1384, %v1384
    %v1387 = vmul.f32 %v1385, %v1385
    %v1388 = vsel %vm68, %v1386, 0.0
    %1389 = vadd.xlane.f32.xlu0 %v1388
    %v1390 = vpop.xlane.xlu0 %1389
    %v1391 = vsel %vm68, %v1387, 0.0
    %1392 = vadd.xlane.f32.xlu0 %v1391
    %v1393 = vpop.xlane.xlu0 %1392
    %v1394 = vmul.f32 %v1390, %v1135
    %v1395 = vmul.f32 %v1393, %v1135
    %v1396 = vadd.f32 %v1394, 1e-05
    %v1397 = vadd.f32 %v1395, 1e-05
    %v1398 = vrsqrt.pop %v1396
    %v1399 = vrsqrt.pop %v1397
    %v1400 = vmul.f32 %v1384, %v1398
    %v1401 = vmul.f32 %v1385, %v1399
    %v1402 = vlaneseq
    %v1403 = vshrl.u32 %v1402, 7
    %v1404 = vsub.s32 0, %v1403
    %v1405 = vrot.slane %v62, %v1404
    %v1406 = vmul.f32 %v1400, %v1405
    %v1407 = vmul.f32 %v1401, %v1405
    %v1408 = vlaneseq
    %v1409 = vshrl.u32 %v1408, 7
    %v1410 = vsub.s32 0, %v1409
    %v1411 = vrot.slane %v63, %v1410
    %v1412 = vadd.f32 %v1406, %v1411
    %v1413 = vadd.f32 %v1407, %v1411
    %1414 = vst.msk [vmem:[#allocation2] sm:$0xff] %vm68, %v1412
    %1415 = vst.msk [vmem:[#allocation2 + $0x8] sm:$0xff] %vm68, %v1413
    // Predicated region
    $region26: #{tpu_custom_call.1} parent=1 // pred_check
      _
    $region27: #{tpu_custom_call.1} parent=1 // pred_check_branch
      %1417 = sbr.rel (0) target = $region29
    $region28: #{tpu_custom_call.1} parent=1 // pred_region
      %s1419 = ssub.s32 256, 256
      %1420 = vsyncadd [#allocation3], %s1419
      %s1421 = sshll.u32 [#allocation2], 4
      %s1422 = int_to_ptr.vmem [resolvable:$true] %s1421
      %1427 = dma.vmem_to_hbm [thread:$0]  %s1422, 256, %s6, [#allocation3], 128, 128, 8
    $region29: #{tpu_custom_call.1} parent=1 // pred_fallthru
      _
    // Predicated region
    $region30: #{tpu_custom_call.1} parent=1 // pred_check
      _
    $region31: #{tpu_custom_call.1} parent=1 // pred_check_branch
      %1429 = sbr.rel (0) target = $region33
    $region32: #{tpu_custom_call.1} parent=1 // pred_region
      %1430 = dma.done [#allocation3], 256
    $region33: #{tpu_custom_call.1} parent=1 // pred_fallthru
      _
    %1431 = vsyncpa [#allocation3], 1

</llo_original>
